<compile_context>
chip_gen: v7x
topology: tpu7x:2x2x1
jax: 0.10.0
libtpu: 0.0.40
codegen_flags: <defaults>
</compile_context>

<pallas_src>
from functools import partial

import jax
import jax.numpy as jnp
from jax.experimental import pallas as pl
from jax.experimental.pallas import tpu as pltpu

EPS = 1e-5  # nn.BatchNorm1d default eps


def fcn_kernel(TB, L, x_ref, w1, s1, t1, w2, s2, t2, w3, s3, t3,
               out_ref, h1p, h2p):
    """One grid step = TB batch rows, time-major layout.

    x_ref : (L, TB, K1p)   bf16  im2col'd layer-1 input (K zero-padded >= 128)
    w1    : (K1p, 128)     bf16  layer-1 weights, taps folded into K
    w2    : (640, 256)     bf16  layer-2 weights, 5 taps folded into K
    w3    : (768, 128)     bf16  layer-3 weights, 3 taps folded into K
    s*/t* : (1, C)         f32   folded eval-mode BN scale / shift (+conv bias)
    out   : (TB, 128)      f32   pooled embedding (linear head done in XLA)
    h1p   : (L+4, TB, 128) bf16  layer-1 acts, 'same' pad 2 rows each side
    h2p   : (L+2, TB, 256) bf16  layer-2 acts, 'same' pad 1 row each side
    """
    K1p = x_ref.shape[2]

    # Zero only the conv-padding rows (done every step so the kernel stays
    # correct when the parallel batch axis is sharded across TensorCores).
    h1p[pl.ds(0, 2), :, :] = jnp.zeros((2, TB, 128), h1p.dtype)
    h1p[pl.ds(2 + L, 2), :, :] = jnp.zeros((2, TB, 128), h1p.dtype)
    h2p[pl.ds(0, 1), :, :] = jnp.zeros((1, TB, 256), h2p.dtype)
    h2p[pl.ds(1 + L, 1), :, :] = jnp.zeros((1, TB, 256), h2p.dtype)

    # ---- layer 1: Conv1d(Cin -> 128, k=8, 'same') as ONE matmul (K=K1p) ----
    acc1 = jnp.dot(x_ref[...].reshape(L * TB, K1p), w1[...],
                   preferred_element_type=jnp.float32)
    h1 = jnp.maximum(acc1 * s1[...] + t1[...], 0.0)           # (L*TB, 128) f32
    h1p[pl.ds(2, L), :, :] = h1.reshape(L, TB, 128).astype(h1p.dtype)

    # ---- layer 2: Conv1d(128 -> 256, k=5, 'same'), taps folded into K=640 --
    # time-major scratch -> each tap slice is a tile-aligned free view.
    lhs2 = jnp.concatenate([h1p[pl.ds(t, L), :, :] for t in range(5)], axis=-1)
    acc2 = jnp.dot(lhs2.reshape(L * TB, 5 * 128), w2[...],
                   preferred_element_type=jnp.float32)
    h2 = jnp.maximum(acc2 * s2[...] + t2[...], 0.0)
    h2p[pl.ds(1, L), :, :] = h2.reshape(L, TB, 256).astype(h2p.dtype)

    # ---- layer 3: Conv1d(256 -> 128, k=3, 'same'), taps folded into K=768 --
    lhs3 = jnp.concatenate([h2p[pl.ds(t, L), :, :] for t in range(3)], axis=-1)
    acc3 = jnp.dot(lhs3.reshape(L * TB, 3 * 256), w3[...],
                   preferred_element_type=jnp.float32)
    h3 = jnp.maximum(acc3 * s3[...] + t3[...], 0.0)           # (L*TB, 128) f32

    # ---- global mean pool over time: sum * (1/L), reciprocal precomputed ---
    out_ref[...] = (jnp.sum(h3.reshape(L, TB, 128), axis=0)
                    * jnp.float32(1.0 / L)).astype(out_ref.dtype)


def _round_up(x, m):
    return (x + m - 1) // m * m


def _vmem_capacity_bytes():
    """Physical VMEM per TensorCore (128 MiB v5e/v6e, 64 MiB v7x)."""
    try:
        cap = getattr(pltpu.get_tpu_info(), "vmem_capacity_bytes", None)
        if cap:
            return int(cap)
    except Exception:
        pass
    return 64 * 1024 * 1024   # conservative fallback (v7x per-TC)


def fcn_forward(x_ncl, params, num_classes):
    """Forward pass. x_ncl: (B, C_in, L) float32 (PyTorch Conv1d NCL layout)."""
    if x_ncl.ndim == 2:                          # mirrors torch `x.unsqueeze(1)`
        x_ncl = x_ncl[:, None, :]
    B, Cin, L = x_ncl.shape
    (w1, s1, t1, w2, s2, t2, w3, s3, t3, wl, bl) = params

    K1 = 8 * Cin
    K1p = _round_up(max(K1, 128), 128)           # lane-dense K for DMA / vregs

    # ---- VMEM budget -> per-generation tile size + explicit scoped limit ----
    vmem_cap = _vmem_capacity_bytes()
    vmem_limit = int(min(vmem_cap * 3 // 4, 100 * 1024 * 1024))
    # Conservative live bytes per (batch row x time step) at the peak:
    #   double-buffered input block + bf16 scratches + layer-2/3 im2col
    #   concats + f32 accumulators.
    bytes_per_row_step = (2 * 2 * K1p                    # input block x2 bufs
                          + 2 * (128 + 256)              # h1p + h2p scratches
                          + 2 * 640 + 4 * 256 + 2 * 256  # layer-2 live temps
                          + 2 * 768 + 4 * 128)           # layer-3 live temps
    tb_cap = (vmem_limit // 2) // max(1, bytes_per_row_step * L)
    tb_cap = max(8, tb_cap // 8 * 8)
    # >= 2 grid steps whenever possible so v7x's 2 TensorCores both get work.
    tb_half = _round_up(max(1, pl.cdiv(B, 2)), 8)
    tb = max(8, min(tb_cap, tb_half, 256))
    B_pad = _round_up(B, tb)
    # TODO(synk): for extreme L where even tb=8 overflows the budget, chunk
    # the M = L*TB dimension in-kernel instead of shrinking tb further.

    # ---- layer-1 im2col in XLA, time-major (M ordered as (L, batch)) -------
    # PyTorch padding='same' for even k=8: left 3, right 4.
    x = jnp.transpose(x_ncl, (0, 2, 1)).astype(jnp.float32)       # (B, L, Cin)
    x_pad = jnp.pad(x, ((0, 0), (3, 4), (0, 0)))
    x_col = jnp.concatenate([x_pad[:, t:t + L, :] for t in range(8)], axis=-1)
    x_col = jnp.transpose(x_col, (1, 0, 2))                       # (L, B, 8Cin)
    x_col = jnp.pad(x_col, ((0, 0), (0, B_pad - B), (0, K1p - K1)))
    x_col = x_col.astype(jnp.bfloat16)
    # TODO(synk): the wrapper-side im2col moves ~8x the raw input through HBM;
    # it could be built in-kernel, but the kernel is heavily compute-bound.

    # bf16 weights (native MXU input type); accumulation stays f32 in-kernel.
    w1f = jnp.pad(w1.reshape(K1, 128),
                  ((0, K1p - K1), (0, 0))).astype(jnp.bfloat16)
    w2f = w2.reshape(5 * 128, 256).astype(jnp.bfloat16)
    w3f = w3.reshape(3 * 256, 128).astype(jnp.bfloat16)

    def full_spec(a):
        zeros = (0,) * a.ndim
        return pl.BlockSpec(a.shape, lambda b, _z=zeros: _z)

    grid_spec = pltpu.PrefetchScalarGridSpec(
        num_scalar_prefetch=0,
        grid=(B_pad // tb,),
        in_specs=[
            pl.BlockSpec((L, tb, K1p), lambda b: (0, b, 0)),   # tb batch rows
            full_spec(w1f), full_spec(s1), full_spec(t1),
            full_spec(w2f), full_spec(s2), full_spec(t2),
            full_spec(w3f), full_spec(s3), full_spec(t3),
        ],
        out_specs=pl.BlockSpec((tb, 128), lambda b: (b, 0)),   # lane-dense
        scratch_shapes=[
            pltpu.VMEM((L + 4, tb, 128), jnp.bfloat16),  # padded layer-1 acts
            pltpu.VMEM((L + 2, tb, 256), jnp.bfloat16),  # padded layer-2 acts
        ],
    )

    emb = pl.pallas_call(
        partial(fcn_kernel, tb, L),
        out_shape=jax.ShapeDtypeStruct((B_pad, 128), jnp.float32),
        grid_spec=grid_spec,
        compiler_params=pltpu.CompilerParams(
            dimension_semantics=("parallel",),   # batch blocks are independent
            vmem_limit_bytes=vmem_limit),
    )(x_col, w1f, s1, t1, w2f, s2, t2, w3f, s3, t3)

    # Tiny (128 x n_out) linear head in XLA keeps the kernel output lane-dense.
    return emb[:B] @ wl + bl                                      # (B, n_out)


def init_params(key, in_dim, num_classes):
    """Deterministic synthetic parameters matching the PyTorch module's shapes."""
    n_out = 1 if num_classes == 2 else num_classes
    keys = jax.random.split(key, 20)

    def conv_bn(kw, kb, kg, kbe, km, kv, k, cin, cout):
        w = 0.1 * jax.random.normal(kw, (cout, cin, k), jnp.float32)  # torch layout
        b = 0.1 * jax.random.normal(kb, (cout,), jnp.float32)
        gamma = 1.0 + 0.1 * jax.random.normal(kg, (cout,), jnp.float32)
        beta = 0.1 * jax.random.normal(kbe, (cout,), jnp.float32)
        rmean = 0.1 * jax.random.normal(km, (cout,), jnp.float32)
        rvar = 1.0 + 0.1 * jnp.abs(jax.random.normal(kv, (cout,), jnp.float32))
        scale = gamma / jnp.sqrt(rvar + EPS)          # eval-mode BN folded
        shift = (b - rmean) * scale + beta            # conv bias folded too
        w_kio = jnp.transpose(w, (2, 1, 0))           # (k, cin, cout) for matmul
        return w_kio, scale[None, :], shift[None, :]

    w1, s1, t1 = conv_bn(*keys[0:6], 8, in_dim, 128)
    w2, s2, t2 = conv_bn(*keys[6:12], 5, 128, 256)
    w3, s3, t3 = conv_bn(*keys[12:18], 3, 256, 128)
    wl = 0.1 * jax.random.normal(keys[18], (128, n_out), jnp.float32)
    bl = 0.1 * jax.random.normal(keys[19], (1, n_out), jnp.float32)
    return (w1, s1, t1, w2, s2, t2, w3, s3, t3, wl, bl)


def ref_forward(x_ncl, params, num_classes):
    """Pure-JAX reference with matching bf16 activations / f32 accumulation."""
    if x_ncl.ndim == 2:
        x_ncl = x_ncl[:, None, :]
    (w1, s1, t1, w2, s2, t2, w3, s3, t3, wl, bl) = params
    h = jnp.transpose(x_ncl, (0, 2, 1)).astype(jnp.float32)

    def layer(h, w, s, t, pad_l, pad_r):
        B, L, _ = h.shape
        hp = jnp.pad(h.astype(jnp.bfloat16), ((0, 0), (pad_l, pad_r), (0, 0)))
        wb = w.astype(jnp.bfloat16)
        acc = sum(jnp.einsum('blc,cd->bld', hp[:, u:u + L, :], wb[u],
                             preferred_element_type=jnp.float32)
                  for u in range(w.shape[0]))
        return jnp.maximum(acc * s[None] + t[None], 0.0)

    h = layer(h, w1, s1, t1, 3, 4)
    h = layer(h, w2, s2, t2, 2, 2)
    h = layer(h, w3, s3, t3, 1, 1)
    emb = jnp.mean(h, axis=1)
    return emb @ wl + bl


if __name__ == "__main__":
    B, in_dim, L, num_classes = 2, 4, 16, 4
    key = jax.random.PRNGKey(0)
    kx, kp = jax.random.split(key)
    x = jax.random.normal(kx, (B, in_dim, L), jnp.float32)   # (B, C_in, L), NCL
    params = init_params(kp, in_dim, num_classes)

    logits = fcn_forward(x, params, num_classes)
    logits = jax.block_until_ready(logits)

    ref = ref_forward(x, params, num_classes)
    assert logits.shape == (B, num_classes), logits.shape
    assert jnp.allclose(logits, ref, atol=2e-2, rtol=2e-2), (logits, ref)
    print("KERNEL_OK")
</pallas_src>

<mosaic_0001>
module attributes {stable_mosaic.version = 11 : i64} {
  func.func @fcn_kernel(%arg0: i32, %arg1: memref<16x8x128xbf16, #tpu.memory_space<vmem>>, %arg2: memref<128x128xbf16, #tpu.memory_space<vmem>>, %arg3: memref<1x128xf32, #tpu.memory_space<vmem>>, %arg4: memref<1x128xf32, #tpu.memory_space<vmem>>, %arg5: memref<640x256xbf16, #tpu.memory_space<vmem>>, %arg6: memref<1x256xf32, #tpu.memory_space<vmem>>, %arg7: memref<1x256xf32, #tpu.memory_space<vmem>>, %arg8: memref<768x128xbf16, #tpu.memory_space<vmem>>, %arg9: memref<1x128xf32, #tpu.memory_space<vmem>>, %arg10: memref<1x128xf32, #tpu.memory_space<vmem>>, %arg11: memref<8x128xf32, #tpu.memory_space<vmem>>, %arg12: memref<20x8x128xbf16, #tpu.memory_space<vmem>>, %arg13: memref<18x8x256xbf16, #tpu.memory_space<vmem>>) attributes {dimension_semantics = [#tpu.dimension_semantics<parallel>], iteration_bounds = array<i64: 1>, scalar_prefetch = 0 : i64, scratch_operands = 2 : i64, tpu.core_type = #tpu.core_type<tc>, window_params = [{transform_indices = @transform_0, window_bounds = array<i64: 16, 8, 128>}, {pipeline_mode = #tpu.pipeline_mode<synchronous>, transform_indices = @transform_1, window_bounds = array<i64: 128, 128>}, {pipeline_mode = #tpu.pipeline_mode<synchronous>, transform_indices = @transform_2, window_bounds = array<i64: 1, 128>}, {pipeline_mode = #tpu.pipeline_mode<synchronous>, transform_indices = @transform_3, window_bounds = array<i64: 1, 128>}, {pipeline_mode = #tpu.pipeline_mode<synchronous>, transform_indices = @transform_4, window_bounds = array<i64: 640, 256>}, {pipeline_mode = #tpu.pipeline_mode<synchronous>, transform_indices = @transform_5, window_bounds = array<i64: 1, 256>}, {pipeline_mode = #tpu.pipeline_mode<synchronous>, transform_indices = @transform_6, window_bounds = array<i64: 1, 256>}, {pipeline_mode = #tpu.pipeline_mode<synchronous>, transform_indices = @transform_7, window_bounds = array<i64: 768, 128>}, {pipeline_mode = #tpu.pipeline_mode<synchronous>, transform_indices = @transform_8, window_bounds = array<i64: 1, 128>}, {pipeline_mode = #tpu.pipeline_mode<synchronous>, transform_indices = @transform_9, window_bounds = array<i64: 1, 128>}, {transform_indices = @transform_10, window_bounds = array<i64: 8, 128>}]} {
    %cst = arith.constant 0.000000e+00 : bf16
    %0 = vector.broadcast %cst : bf16 to vector<2x8x128xbf16>
    %c0 = arith.constant 0 : index
    %c0_0 = arith.constant 0 : index
    %c0_1 = arith.constant 0 : index
    %1 = vector.load %arg12[%c0, %c0_0, %c0_1] : memref<20x8x128xbf16, #tpu.memory_space<vmem>>, vector<2x8x128xbf16>
    tpu.vector_store %arg12[%c0, %c0_0, %c0_1], %0 {strides = array<i32>} : memref<20x8x128xbf16, #tpu.memory_space<vmem>>, vector<2x8x128xbf16>,
    %cst_2 = arith.constant 0.000000e+00 : bf16
    %2 = vector.broadcast %cst_2 : bf16 to vector<2x8x128xbf16>
    %c18 = arith.constant 18 : index
    %c0_3 = arith.constant 0 : index
    %c0_4 = arith.constant 0 : index
    %3 = vector.load %arg12[%c18, %c0_3, %c0_4] : memref<20x8x128xbf16, #tpu.memory_space<vmem>>, vector<2x8x128xbf16>
    tpu.vector_store %arg12[%c18, %c0_3, %c0_4], %2 {strides = array<i32>} : memref<20x8x128xbf16, #tpu.memory_space<vmem>>, vector<2x8x128xbf16>,
    %cst_5 = arith.constant 0.000000e+00 : bf16
    %4 = vector.broadcast %cst_5 : bf16 to vector<1x8x256xbf16>
    %c0_6 = arith.constant 0 : index
    %c0_7 = arith.constant 0 : index
    %c0_8 = arith.constant 0 : index
    %5 = vector.load %arg13[%c0_6, %c0_7, %c0_8] : memref<18x8x256xbf16, #tpu.memory_space<vmem>>, vector<1x8x256xbf16>
    tpu.vector_store %arg13[%c0_6, %c0_7, %c0_8], %4 {strides = array<i32>} : memref<18x8x256xbf16, #tpu.memory_space<vmem>>, vector<1x8x256xbf16>,
    %cst_9 = arith.constant 0.000000e+00 : bf16
    %6 = vector.broadcast %cst_9 : bf16 to vector<1x8x256xbf16>
    %c17 = arith.constant 17 : index
    %c0_10 = arith.constant 0 : index
    %c0_11 = arith.constant 0 : index
    %7 = vector.load %arg13[%c17, %c0_10, %c0_11] : memref<18x8x256xbf16, #tpu.memory_space<vmem>>, vector<1x8x256xbf16>
    tpu.vector_store %arg13[%c17, %c0_10, %c0_11], %6 {strides = array<i32>} : memref<18x8x256xbf16, #tpu.memory_space<vmem>>, vector<1x8x256xbf16>,
    %c0_12 = arith.constant 0 : index
    %c0_13 = arith.constant 0 : index
    %c0_14 = arith.constant 0 : index
    %8 = vector.load %arg1[%c0_12, %c0_13, %c0_14] : memref<16x8x128xbf16, #tpu.memory_space<vmem>>, vector<16x8x128xbf16>
    %9 = vector.shape_cast %8 : vector<16x8x128xbf16> to vector<128x128xbf16>
    %c0_15 = arith.constant 0 : index
    %c0_16 = arith.constant 0 : index
    %10 = vector.load %arg2[%c0_15, %c0_16] : memref<128x128xbf16, #tpu.memory_space<vmem>>, vector<128x128xbf16>
    %cst_17 = arith.constant dense<0.000000e+00> : vector<128x128xf32>
    %11 = tpu.matmul %9, %10, %cst_17 {dimension_numbers = #tpu.dot_dimension_numbers<[1], [0], [0], [1], [0, 0, 1, 1], [], []>} : vector<128x128xbf16>, vector<128x128xbf16>, vector<128x128xf32> -> vector<128x128xf32>
    %c0_18 = arith.constant 0 : index
    %c0_19 = arith.constant 0 : index
    %12 = vector.load %arg3[%c0_18, %c0_19] : memref<1x128xf32, #tpu.memory_space<vmem>>, vector<1x128xf32>
    %13 = vector.broadcast %12 : vector<1x128xf32> to vector<128x128xf32>
    %14 = arith.mulf %11, %13 : vector<128x128xf32>
    %c0_20 = arith.constant 0 : index
    %c0_21 = arith.constant 0 : index
    %15 = vector.load %arg4[%c0_20, %c0_21] : memref<1x128xf32, #tpu.memory_space<vmem>>, vector<1x128xf32>
    %16 = vector.broadcast %15 : vector<1x128xf32> to vector<128x128xf32>
    %17 = arith.addf %14, %16 : vector<128x128xf32>
    %cst_22 = arith.constant 0.000000e+00 : f32
    %18 = vector.broadcast %cst_22 : f32 to vector<128x128xf32>
    %19 = arith.maximumf %17, %18 : vector<128x128xf32>
    %20 = vector.shape_cast %19 : vector<128x128xf32> to vector<16x8x128xf32>
    %21 = arith.truncf %20 : vector<16x8x128xf32> to vector<16x8x128xbf16>
    %c2 = arith.constant 2 : index
    %c0_23 = arith.constant 0 : index
    %c0_24 = arith.constant 0 : index
    %22 = vector.load %arg12[%c2, %c0_23, %c0_24] : memref<20x8x128xbf16, #tpu.memory_space<vmem>>, vector<16x8x128xbf16>
    tpu.vector_store %arg12[%c2, %c0_23, %c0_24], %21 {strides = array<i32>} : memref<20x8x128xbf16, #tpu.memory_space<vmem>>, vector<16x8x128xbf16>,
    %c0_25 = arith.constant 0 : index
    %c0_26 = arith.constant 0 : index
    %c0_27 = arith.constant 0 : index
    %23 = vector.load %arg12[%c0_25, %c0_26, %c0_27] : memref<20x8x128xbf16, #tpu.memory_space<vmem>>, vector<16x8x128xbf16>
    %c1 = arith.constant 1 : index
    %c0_28 = arith.constant 0 : index
    %c0_29 = arith.constant 0 : index
    %24 = vector.load %arg12[%c1, %c0_28, %c0_29] : memref<20x8x128xbf16, #tpu.memory_space<vmem>>, vector<16x8x128xbf16>
    %c2_30 = arith.constant 2 : index
    %c0_31 = arith.constant 0 : index
    %c0_32 = arith.constant 0 : index
    %25 = vector.load %arg12[%c2_30, %c0_31, %c0_32] : memref<20x8x128xbf16, #tpu.memory_space<vmem>>, vector<16x8x128xbf16>
    %c3 = arith.constant 3 : index
    %c0_33 = arith.constant 0 : index
    %c0_34 = arith.constant 0 : index
    %26 = vector.load %arg12[%c3, %c0_33, %c0_34] : memref<20x8x128xbf16, #tpu.memory_space<vmem>>, vector<16x8x128xbf16>
    %c4 = arith.constant 4 : index
    %c0_35 = arith.constant 0 : index
    %c0_36 = arith.constant 0 : index
    %27 = vector.load %arg12[%c4, %c0_35, %c0_36] : memref<20x8x128xbf16, #tpu.memory_space<vmem>>, vector<16x8x128xbf16>
    %28 = tpu.concatenate %23, %24, %25, %26, %27 in 2 : vector<16x8x128xbf16>, vector<16x8x128xbf16>, vector<16x8x128xbf16>, vector<16x8x128xbf16>, vector<16x8x128xbf16> -> vector<16x8x640xbf16>
    %29 = vector.shape_cast %28 : vector<16x8x640xbf16> to vector<128x640xbf16>
    %c0_37 = arith.constant 0 : index
    %c0_38 = arith.constant 0 : index
    %30 = vector.load %arg5[%c0_37, %c0_38] : memref<640x256xbf16, #tpu.memory_space<vmem>>, vector<640x256xbf16>
    %cst_39 = arith.constant dense<0.000000e+00> : vector<128x256xf32>
    %31 = tpu.matmul %29, %30, %cst_39 {dimension_numbers = #tpu.dot_dimension_numbers<[1], [0], [0], [1], [0, 0, 1, 1], [], []>} : vector<128x640xbf16>, vector<640x256xbf16>, vector<128x256xf32> -> vector<128x256xf32>
    %c0_40 = arith.constant 0 : index
    %c0_41 = arith.constant 0 : index
    %32 = vector.load %arg6[%c0_40, %c0_41] : memref<1x256xf32, #tpu.memory_space<vmem>>, vector<1x256xf32>
    %33 = vector.broadcast %32 : vector<1x256xf32> to vector<128x256xf32>
    %34 = arith.mulf %31, %33 : vector<128x256xf32>
    %c0_42 = arith.constant 0 : index
    %c0_43 = arith.constant 0 : index
    %35 = vector.load %arg7[%c0_42, %c0_43] : memref<1x256xf32, #tpu.memory_space<vmem>>, vector<1x256xf32>
    %36 = vector.broadcast %35 : vector<1x256xf32> to vector<128x256xf32>
    %37 = arith.addf %34, %36 : vector<128x256xf32>
    %cst_44 = arith.constant 0.000000e+00 : f32
    %38 = vector.broadcast %cst_44 : f32 to vector<128x256xf32>
    %39 = arith.maximumf %37, %38 : vector<128x256xf32>
    %40 = vector.shape_cast %39 : vector<128x256xf32> to vector<16x8x256xf32>
    %41 = arith.truncf %40 : vector<16x8x256xf32> to vector<16x8x256xbf16>
    %c1_45 = arith.constant 1 : index
    %c0_46 = arith.constant 0 : index
    %c0_47 = arith.constant 0 : index
    %42 = vector.load %arg13[%c1_45, %c0_46, %c0_47] : memref<18x8x256xbf16, #tpu.memory_space<vmem>>, vector<16x8x256xbf16>
    tpu.vector_store %arg13[%c1_45, %c0_46, %c0_47], %41 {strides = array<i32>} : memref<18x8x256xbf16, #tpu.memory_space<vmem>>, vector<16x8x256xbf16>,
    %c0_48 = arith.constant 0 : index
    %c0_49 = arith.constant 0 : index
    %c0_50 = arith.constant 0 : index
    %43 = vector.load %arg13[%c0_48, %c0_49, %c0_50] : memref<18x8x256xbf16, #tpu.memory_space<vmem>>, vector<16x8x256xbf16>
    %c1_51 = arith.constant 1 : index
    %c0_52 = arith.constant 0 : index
    %c0_53 = arith.constant 0 : index
    %44 = vector.load %arg13[%c1_51, %c0_52, %c0_53] : memref<18x8x256xbf16, #tpu.memory_space<vmem>>, vector<16x8x256xbf16>
    %c2_54 = arith.constant 2 : index
    %c0_55 = arith.constant 0 : index
    %c0_56 = arith.constant 0 : index
    %45 = vector.load %arg13[%c2_54, %c0_55, %c0_56] : memref<18x8x256xbf16, #tpu.memory_space<vmem>>, vector<16x8x256xbf16>
    %46 = tpu.concatenate %43, %44, %45 in 2 : vector<16x8x256xbf16>, vector<16x8x256xbf16>, vector<16x8x256xbf16> -> vector<16x8x768xbf16>
    %47 = vector.shape_cast %46 : vector<16x8x768xbf16> to vector<128x768xbf16>
    %c0_57 = arith.constant 0 : index
    %c0_58 = arith.constant 0 : index
    %48 = vector.load %arg8[%c0_57, %c0_58] : memref<768x128xbf16, #tpu.memory_space<vmem>>, vector<768x128xbf16>
    %cst_59 = arith.constant dense<0.000000e+00> : vector<128x128xf32>
    %49 = tpu.matmul %47, %48, %cst_59 {dimension_numbers = #tpu.dot_dimension_numbers<[1], [0], [0], [1], [0, 0, 1, 1], [], []>} : vector<128x768xbf16>, vector<768x128xbf16>, vector<128x128xf32> -> vector<128x128xf32>
    %c0_60 = arith.constant 0 : index
    %c0_61 = arith.constant 0 : index
    %50 = vector.load %arg9[%c0_60, %c0_61] : memref<1x128xf32, #tpu.memory_space<vmem>>, vector<1x128xf32>
    %51 = vector.broadcast %50 : vector<1x128xf32> to vector<128x128xf32>
    %52 = arith.mulf %49, %51 : vector<128x128xf32>
    %c0_62 = arith.constant 0 : index
    %c0_63 = arith.constant 0 : index
    %53 = vector.load %arg10[%c0_62, %c0_63] : memref<1x128xf32, #tpu.memory_space<vmem>>, vector<1x128xf32>
    %54 = vector.broadcast %53 : vector<1x128xf32> to vector<128x128xf32>
    %55 = arith.addf %52, %54 : vector<128x128xf32>
    %cst_64 = arith.constant 0.000000e+00 : f32
    %56 = vector.broadcast %cst_64 : f32 to vector<128x128xf32>
    %57 = arith.maximumf %55, %56 : vector<128x128xf32>
    %58 = vector.shape_cast %57 : vector<128x128xf32> to vector<16x8x128xf32>
    %cst_65 = arith.constant dense<0.000000e+00> : vector<8x128xf32>
    %59 = vector.multi_reduction <add>, %58, %cst_65 [0] : vector<16x8x128xf32> to vector<8x128xf32>
    %cst_66 = arith.constant 6.250000e-02 : f32
    %60 = vector.broadcast %cst_66 : f32 to vector<8x128xf32>
    %61 = arith.mulf %59, %60 : vector<8x128xf32>
    %c0_67 = arith.constant 0 : index
    %c0_68 = arith.constant 0 : index
    %62 = vector.load %arg11[%c0_67, %c0_68] : memref<8x128xf32, #tpu.memory_space<vmem>>, vector<8x128xf32>
    tpu.vector_store %arg11[%c0_67, %c0_68], %61 {strides = array<i32>} : memref<8x128xf32, #tpu.memory_space<vmem>>, vector<8x128xf32>,
    return
  }
  func.func @transform_0(%arg0: i32) -> (i32, i32, i32) {
    %c0_i32 = arith.constant 0 : i32
    %c0_i32_0 = arith.constant 0 : i32
    %c0_i32_1 = arith.constant 0 : i32
    return %c0_i32, %arg0, %c0_i32_0 : i32, i32, i32
  }
  func.func @transform_1(%arg0: i32) -> (i32, i32) {
    %c0_i32 = arith.constant 0 : i32
    %c0_i32_0 = arith.constant 0 : i32
    %c0_i32_1 = arith.constant 0 : i32
    return %c0_i32, %c0_i32_0 : i32, i32
  }
  func.func @transform_2(%arg0: i32) -> (i32, i32) {
    %c0_i32 = arith.constant 0 : i32
    %c0_i32_0 = arith.constant 0 : i32
    %c0_i32_1 = arith.constant 0 : i32
    return %c0_i32, %c0_i32_0 : i32, i32
  }
  func.func @transform_3(%arg0: i32) -> (i32, i32) {
    %c0_i32 = arith.constant 0 : i32
    %c0_i32_0 = arith.constant 0 : i32
    %c0_i32_1 = arith.constant 0 : i32
    return %c0_i32, %c0_i32_0 : i32, i32
  }
  func.func @transform_4(%arg0: i32) -> (i32, i32) {
    %c0_i32 = arith.constant 0 : i32
    %c0_i32_0 = arith.constant 0 : i32
    %c0_i32_1 = arith.constant 0 : i32
    return %c0_i32, %c0_i32_0 : i32, i32
  }
  func.func @transform_5(%arg0: i32) -> (i32, i32) {
    %c0_i32 = arith.constant 0 : i32
    %c0_i32_0 = arith.constant 0 : i32
    %c0_i32_1 = arith.constant 0 : i32
    return %c0_i32, %c0_i32_0 : i32, i32
  }
  func.func @transform_6(%arg0: i32) -> (i32, i32) {
    %c0_i32 = arith.constant 0 : i32
    %c0_i32_0 = arith.constant 0 : i32
    %c0_i32_1 = arith.constant 0 : i32
    return %c0_i32, %c0_i32_0 : i32, i32
  }
  func.func @transform_7(%arg0: i32) -> (i32, i32) {
    %c0_i32 = arith.constant 0 : i32
    %c0_i32_0 = arith.constant 0 : i32
    %c0_i32_1 = arith.constant 0 : i32
    return %c0_i32, %c0_i32_0 : i32, i32
  }
  func.func @transform_8(%arg0: i32) -> (i32, i32) {
    %c0_i32 = arith.constant 0 : i32
    %c0_i32_0 = arith.constant 0 : i32
    %c0_i32_1 = arith.constant 0 : i32
    return %c0_i32, %c0_i32_0 : i32, i32
  }
  func.func @transform_9(%arg0: i32) -> (i32, i32) {
    %c0_i32 = arith.constant 0 : i32
    %c0_i32_0 = arith.constant 0 : i32
    %c0_i32_1 = arith.constant 0 : i32
    return %c0_i32, %c0_i32_0 : i32, i32
  }
  func.func @transform_10(%arg0: i32) -> (i32, i32) {
    %c0_i32 = arith.constant 0 : i32
    %c0_i32_0 = arith.constant 0 : i32
    return %arg0, %c0_i32 : i32, i32
  }
}

</mosaic_0001>

<llo_original>
// kernel: tpu_custom_call.1
$region0: #{tpu_custom_call.1}
  #allocation0 [shape = 'u32[]', space=smem, size = 0x4, offset = 0x4, fixed_abs, tag = 'smem constant byte address 0x4 - core index']
  #allocation1 [shape = 'u32[144,128]{1,0:T(1,128)}', space=vmem, size = 0x12000, scoped, tag = 'internal scratch']
  #allocation2 [shape = 'bf16[20,8,128]{2,1,0:T(8,128)(2,1)}', space=vmem, size = 0xa000, scoped, tag = 'scratch operand']
  #allocation3 [shape = 'bf16[18,8,256]{2,1,0:T(8,128)(2,1)}', space=vmem, size = 0x12000, scoped, tag = 'scratch operand']
  %s0 = inlined_call_operand.hbm [shape: bf16[16,8,128], index: 0, kind: input, shape index: {}]
  %s1 = inlined_call_operand.hbm [shape: bf16[128,128], index: 1, kind: input, shape index: {}]
  %s2 = inlined_call_operand.vmem [shape: f32[1,128], index: 2, kind: input, shape index: {}]
  %s3 = inlined_call_operand.vmem [shape: f32[1,128], index: 3, kind: input, shape index: {}]
  %s4 = inlined_call_operand.hbm [shape: bf16[640,256], index: 4, kind: input, shape index: {}]
  %s5 = inlined_call_operand.vmem [shape: f32[1,256], index: 5, kind: input, shape index: {}]
  %s6 = inlined_call_operand.vmem [shape: f32[1,256], index: 6, kind: input, shape index: {}]
  %s7 = inlined_call_operand.hbm [shape: bf16[768,128], index: 7, kind: input, shape index: {}]
  %s8 = inlined_call_operand.vmem [shape: f32[1,128], index: 8, kind: input, shape index: {}]
  %s9 = inlined_call_operand.vmem [shape: f32[1,128], index: 9, kind: input, shape index: {}]
  %s10 = inlined_call_operand.hbm [shape: f32[8,128], index: 10, kind: output, shape index: {}]
  %s11 = sld [smem:[#allocation0]]
  $region66: #{tpu_custom_call.1} parent=0
    _
  %s13 = ssub.s32 1, %s11
  %s14 = scalar_select 0, %s13, %s11
  $region1: #{tpu_custom_call.1} parent=0
    #allocation4 [shape = 'u8[32768]{0}', space=vmem, size = 0x8000, scoped, tag = 'input window, operand 0, single buffered']
    #allocation5 [shape = 's32[1]{0}', space=sflag, size = 0x4, scoped, tag = 'scoped memory for tpu_custom_call.1']
    #allocation6 [shape = 's32[1]{0}', space=sflag, size = 0x4, scoped, tag = 'scoped memory for tpu_custom_call.1']
    #allocation7 [shape = 'u8[32768]{0}', space=vmem, size = 0x8000, scoped, tag = 'input window, operand 1, single buffered']
    #allocation8 [shape = 's32[1]{0}', space=sflag, size = 0x4, scoped, tag = 'scoped memory for tpu_custom_call.1']
    #allocation9 [shape = 'u8[327680]{0}', space=vmem, size = 0x50000, scoped, tag = 'input window, operand 4, single buffered']
    #allocation10 [shape = 'u8[196608]{0}', space=vmem, size = 0x30000, scoped, tag = 'input window, operand 7, single buffered']
    #allocation11 [shape = 's32[1]{0}', space=sflag, size = 0x4, scoped, tag = 'scoped memory for tpu_custom_call.1']
    #allocation12 [shape = 'u8[4096]{0}', space=vmem, size = 0x1000, scoped, tag = 'output window, operand 0, single buffered']
    %15 = vsyncpa [#allocation5], 0
    %16 = vsyncpa [#allocation8], 0
    %17 = vsyncpa [#allocation11], 0
    %18 = vsyncpa [#allocation6], 0
    // Predicated region
    $region2: #{tpu_custom_call.1} parent=1 // pred_check
      _
    $region3: #{tpu_custom_call.1} parent=1 // pred_check_branch
      %20 = sbr.rel (0) target = $region5
    $region4: #{tpu_custom_call.1} parent=1 // pred_region
      %s22 = ssub.s32 1024, 1024
      %23 = vsyncadd [#allocation5], %s22
      %s24 = sshll.u32 [#allocation4], 4
      %s25 = int_to_ptr.vmem [resolvable:$true] %s24
      %30 = dma.hbm_to_vmem [thread:$0]  %s0, 1024, %s25, [#allocation5], 64, 64, 4
    $region5: #{tpu_custom_call.1} parent=1 // pred_fallthru
      _
    // Predicated region
    $region6: #{tpu_custom_call.1} parent=1 // pred_check
      _
    $region7: #{tpu_custom_call.1} parent=1 // pred_check_branch
      %32 = sbr.rel (0) target = $region9
    $region8: #{tpu_custom_call.1} parent=1 // pred_region
      %s34 = ssub.s32 1024, 1024
      %35 = vsyncadd [#allocation8], %s34
      %s36 = sshll.u32 [#allocation7], 4
      %s37 = int_to_ptr.vmem [resolvable:$true] %s36
      %42 = dma.hbm_to_vmem [thread:$0]  %s1, 1024, %s37, [#allocation8], 64, 64, 4
    $region9: #{tpu_custom_call.1} parent=1 // pred_fallthru
      _
    // Predicated region
    $region10: #{tpu_custom_call.1} parent=1 // pred_check
      _
    $region11: #{tpu_custom_call.1} parent=1 // pred_check_branch
      %44 = sbr.rel (0) target = $region13
    $region12: #{tpu_custom_call.1} parent=1 // pred_region
      _
    $region13: #{tpu_custom_call.1} parent=1 // pred_fallthru
      _
    // Predicated region
    $region14: #{tpu_custom_call.1} parent=1 // pred_check
      _
    $region15: #{tpu_custom_call.1} parent=1 // pred_check_branch
      %46 = sbr.rel (0) target = $region17
    $region16: #{tpu_custom_call.1} parent=1 // pred_region
      _
    $region17: #{tpu_custom_call.1} parent=1 // pred_fallthru
      _
    // Predicated region
    $region18: #{tpu_custom_call.1} parent=1 // pred_check
      _
    $region19: #{tpu_custom_call.1} parent=1 // pred_check_branch
      %48 = sbr.rel (0) target = $region21
    $region20: #{tpu_custom_call.1} parent=1 // pred_region
      %s50 = ssub.s32 10240, 10240
      %51 = vsyncadd [#allocation8], %s50
      %s52 = sshll.u32 [#allocation9], 4
      %s53 = int_to_ptr.vmem [resolvable:$true] %s52
      %58 = dma.hbm_to_vmem [thread:$0]  %s4, 10240, %s53, [#allocation8], 128, 128, 8
    $region21: #{tpu_custom_call.1} parent=1 // pred_fallthru
      _
    // Predicated region
    $region22: #{tpu_custom_call.1} parent=1 // pred_check
      _
    $region23: #{tpu_custom_call.1} parent=1 // pred_check_branch
      %60 = sbr.rel (0) target = $region25
    $region24: #{tpu_custom_call.1} parent=1 // pred_region
      _
    $region25: #{tpu_custom_call.1} parent=1 // pred_fallthru
      _
    // Predicated region
    $region26: #{tpu_custom_call.1} parent=1 // pred_check
      _
    $region27: #{tpu_custom_call.1} parent=1 // pred_check_branch
      %62 = sbr.rel (0) target = $region29
    $region28: #{tpu_custom_call.1} parent=1 // pred_region
      _
    $region29: #{tpu_custom_call.1} parent=1 // pred_fallthru
      _
    // Predicated region
    $region30: #{tpu_custom_call.1} parent=1 // pred_check
      _
    $region31: #{tpu_custom_call.1} parent=1 // pred_check_branch
      %64 = sbr.rel (0) target = $region33
    $region32: #{tpu_custom_call.1} parent=1 // pred_region
      %s66 = ssub.s32 6144, 6144
      %67 = vsyncadd [#allocation11], %s66
      %s68 = sshll.u32 [#allocation10], 4
      %s69 = int_to_ptr.vmem [resolvable:$true] %s68
      %74 = dma.hbm_to_vmem [thread:$0]  %s7, 6144, %s69, [#allocation11], 64, 64, 4
    $region33: #{tpu_custom_call.1} parent=1 // pred_fallthru
      _
    // Predicated region
    $region34: #{tpu_custom_call.1} parent=1 // pred_check
      _
    $region35: #{tpu_custom_call.1} parent=1 // pred_check_branch
      %76 = sbr.rel (0) target = $region37
    $region36: #{tpu_custom_call.1} parent=1 // pred_region
      _
    $region37: #{tpu_custom_call.1} parent=1 // pred_fallthru
      _
    // Predicated region
    $region38: #{tpu_custom_call.1} parent=1 // pred_check
      _
    $region39: #{tpu_custom_call.1} parent=1 // pred_check_branch
      %78 = sbr.rel (0) target = $region41
    $region40: #{tpu_custom_call.1} parent=1 // pred_region
      _
    $region41: #{tpu_custom_call.1} parent=1 // pred_fallthru
      _
    // Predicated region
    $region42: #{tpu_custom_call.1} parent=1 // pred_check
      _
    $region43: #{tpu_custom_call.1} parent=1 // pred_check_branch
      %80 = sbr.rel (0) target = $region45
    $region44: #{tpu_custom_call.1} parent=1 // pred_region
      %81 = dma.done [#allocation5], 1024
    $region45: #{tpu_custom_call.1} parent=1 // pred_fallthru
      _
    // Predicated region
    $region46: #{tpu_custom_call.1} parent=1 // pred_check
      _
    $region47: #{tpu_custom_call.1} parent=1 // pred_check_branch
      %83 = sbr.rel (0) target = $region49
    $region48: #{tpu_custom_call.1} parent=1 // pred_region
      %84 = dma.done [#allocation8], 1024
    $region49: #{tpu_custom_call.1} parent=1 // pred_fallthru
      _
    // Predicated region
    $region50: #{tpu_custom_call.1} parent=1 // pred_check
      _
    $region51: #{tpu_custom_call.1} parent=1 // pred_check_branch
      %86 = sbr.rel (0) target = $region53
    $region52: #{tpu_custom_call.1} parent=1 // pred_region
      %87 = dma.done [#allocation8], 10240
    $region53: #{tpu_custom_call.1} parent=1 // pred_fallthru
      _
    // Predicated region
    $region54: #{tpu_custom_call.1} parent=1 // pred_check
      _
    $region55: #{tpu_custom_call.1} parent=1 // pred_check_branch
      %89 = sbr.rel (0) target = $region57
    $region56: #{tpu_custom_call.1} parent=1 // pred_region
      %90 = dma.done [#allocation11], 6144
    $region57: #{tpu_custom_call.1} parent=1 // pred_fallthru
      _
    %92 = vst [vmem:[#allocation2] sm:$0xf] 0
    %93 = vst [vmem:[#allocation2 + $0x4] sm:$0xf] 0
    %s94 = scalar_lea.vmem [#allocation2], 72
    %95 = vst [vmem:[%s94] sm:$0xf] 0
    %96 = vst [vmem:[%s94 + $0x4] sm:$0xf] 0
    %97 = vst [vmem:[#allocation3] sm:$0xff] 0
    %s98 = scalar_lea.vmem [#allocation3], 136
    %99 = vst [vmem:[%s98] sm:$0xff] 0
    %v100 = vld [vmem:[#allocation4] sm:$0xf]
    %v101 = vld [vmem:[#allocation4 + $0x4] sm:$0xf]
    %v102 = vld [vmem:[#allocation4 + $0x8] sm:$0xf]
    %v103 = vld [vmem:[#allocation4 + $0xc] sm:$0xf]
    %v104 = vld [vmem:[#allocation4 + $0x10] sm:$0xf]
    %v105 = vld [vmem:[#allocation4 + $0x14] sm:$0xf]
    %v106 = vld [vmem:[#allocation4 + $0x18] sm:$0xf]
    %v107 = vld [vmem:[#allocation4 + $0x1c] sm:$0xf]
    %v108 = vld [vmem:[#allocation4 + $0x20] sm:$0xf]
    %v109 = vld [vmem:[#allocation4 + $0x24] sm:$0xf]
    %v110 = vld [vmem:[#allocation4 + $0x28] sm:$0xf]
    %v111 = vld [vmem:[#allocation4 + $0x2c] sm:$0xf]
    %v112 = vld [vmem:[#allocation4 + $0x30] sm:$0xf]
    %v113 = vld [vmem:[#allocation4 + $0x34] sm:$0xf]
    %v114 = vld [vmem:[#allocation4 + $0x38] sm:$0xf]
    %v115 = vld [vmem:[#allocation4 + $0x3c] sm:$0xf]
    %v116 = vld [vmem:[#allocation7] sm:$0xf]
    %v117 = vld [vmem:[#allocation7 + $0x4] sm:$0xf]
    %v118 = vld [vmem:[#allocation7 + $0x8] sm:$0xf]
    %v119 = vld [vmem:[#allocation7 + $0xc] sm:$0xf]
    %v120 = vld [vmem:[#allocation7 + $0x10] sm:$0xf]
    %v121 = vld [vmem:[#allocation7 + $0x14] sm:$0xf]
    %v122 = vld [vmem:[#allocation7 + $0x18] sm:$0xf]
    %v123 = vld [vmem:[#allocation7 + $0x1c] sm:$0xf]
    %v124 = vld [vmem:[#allocation7 + $0x20] sm:$0xf]
    %v125 = vld [vmem:[#allocation7 + $0x24] sm:$0xf]
    %v126 = vld [vmem:[#allocation7 + $0x28] sm:$0xf]
    %v127 = vld [vmem:[#allocation7 + $0x2c] sm:$0xf]
    %v128 = vld [vmem:[#allocation7 + $0x30] sm:$0xf]
    %v129 = vld [vmem:[#allocation7 + $0x34] sm:$0xf]
    %v130 = vld [vmem:[#allocation7 + $0x38] sm:$0xf]
    %v131 = vld [vmem:[#allocation7 + $0x3c] sm:$0xf]
    %v148 = vunpack.c.l.b16 %v100
    %v149 = vunpack.c.l.b16 %v101
    %v150 = vunpack.c.l.b16 %v102
    %v151 = vunpack.c.l.b16 %v103
    %v152 = vunpack.c.l.b16 %v104
    %v153 = vunpack.c.l.b16 %v105
    %v154 = vunpack.c.l.b16 %v106
    %v155 = vunpack.c.l.b16 %v107
    %v156 = vunpack.c.l.b16 %v108
    %v157 = vunpack.c.l.b16 %v109
    %v158 = vunpack.c.l.b16 %v110
    %v159 = vunpack.c.l.b16 %v111
    %v160 = vunpack.c.l.b16 %v112
    %v161 = vunpack.c.l.b16 %v113
    %v162 = vunpack.c.l.b16 %v114
    %v163 = vunpack.c.l.b16 %v115
    %v164 = vpack.c.b16 %v149, %v148
    %v165 = vpack.c.b16 %v151, %v150
    %v166 = vpack.c.b16 %v153, %v152
    %v167 = vpack.c.b16 %v155, %v154
    %v168 = vpack.c.b16 %v157, %v156
    %v169 = vpack.c.b16 %v159, %v158
    %v170 = vpack.c.b16 %v161, %v160
    %v171 = vpack.c.b16 %v163, %v162
    %v196 = vunpack.c.l.b16 %v116
    %v197 = vunpack.c.l.b16 %v117
    %v198 = vunpack.c.l.b16 %v118
    %v199 = vunpack.c.l.b16 %v119
    %v200 = vunpack.c.l.b16 %v120
    %v201 = vunpack.c.l.b16 %v121
    %v202 = vunpack.c.l.b16 %v122
    %v203 = vunpack.c.l.b16 %v123
    %v204 = vunpack.c.l.b16 %v124
    %v205 = vunpack.c.l.b16 %v125
    %v206 = vunpack.c.l.b16 %v126
    %v207 = vunpack.c.l.b16 %v127
    %v208 = vunpack.c.l.b16 %v128
    %v209 = vunpack.c.l.b16 %v129
    %v210 = vunpack.c.l.b16 %v130
    %v211 = vunpack.c.l.b16 %v131
    %v212 = vpack.c.b16 %v197, %v196
    %v213 = vpack.c.b16 %v199, %v198
    %v214 = vpack.c.b16 %v201, %v200
    %v215 = vpack.c.b16 %v203, %v202
    %v216 = vpack.c.b16 %v205, %v204
    %v217 = vpack.c.b16 %v207, %v206
    %v218 = vpack.c.b16 %v209, %v208
    %v219 = vpack.c.b16 %v211, %v210
    %228 = vmatprep.subr.bf16.mxu0 0
    %229 = vmatpush1.bf16.msra.mxu0 %v212
    %230 = vmatprep.subr.bf16.mxu0 0
    %231 = vmatpush1.bf16.msra.mxu0 %v213
    %232 = vmatprep.subr.bf16.mxu0 0
    %233 = vmatpush1.bf16.msra.mxu0 %v214
    %234 = vmatprep.subr.bf16.mxu0 0
    %235 = vmatpush1.bf16.msra.mxu0 %v215
    %236 = vmatprep.subr.bf16.mxu0 0
    %237 = vmatpush1.bf16.msra.mxu0 %v216
    %238 = vmatprep.subr.bf16.mxu0 0
    %239 = vmatpush1.bf16.msra.mxu0 %v217
    %240 = vmatprep.subr.bf16.mxu0 0
    %241 = vmatpush1.bf16.msra.mxu0 %v218
    %242 = vmatprep.subr.bf16.mxu0 0
    %243 = vmatpush1.bf16.msra.mxu0 %v219
    %244 = vmatprep.subr.bf16.mxu0 0
    %245 = vmatpush1.bf16.msra.mxu0 0
    %246 = vmatprep.subr.bf16.mxu0 0
    %247 = vmatpush1.bf16.msra.mxu0 0
    %248 = vmatprep.subr.bf16.mxu0 0
    %249 = vmatpush1.bf16.msra.mxu0 0
    %250 = vmatprep.subr.bf16.mxu0 0
    %251 = vmatpush1.bf16.msra.mxu0 0
    %252 = vmatprep.subr.bf16.mxu0 0
    %253 = vmatpush1.bf16.msra.mxu0 0
    %254 = vmatprep.subr.bf16.mxu0 0
    %255 = vmatpush1.bf16.msra.mxu0 0
    %256 = vmatprep.subr.bf16.mxu0 0
    %257 = vmatpush1.bf16.msra.mxu0 0
    %258 = vmatprep.subr.bf16.mxu0 0
    %259 = vmatpush1.bf16.msra.mxu0 0
    %260 = vmatprep.mubr.bf16.mxu0 0
    %261 = vmatmul.mubr.bf16.gmra.mrb[0].mxu0 %v164
    %v262 = vpop.f32.mrb[0].mxu0
    %v263 = vadd.f32 0.0, %v262
    %v264 = vpop.f32.mrb[0].mxu0
    %v265 = vpop.f32.mrb[0].mxu0
    %v266 = vadd.f32 0.0, %v265
    %v267 = vpop.f32.mrb[0].mxu0
    %268 = vmatprep.mubr.bf16.mxu0 0
    %269 = vmatmul.mubr.bf16.gmra.mrb[0].mxu0 %v165
    %v270 = vpop.f32.mrb[0].mxu0
    %v271 = vadd.f32 0.0, %v270
    %v272 = vpop.f32.mrb[0].mxu0
    %v273 = vpop.f32.mrb[0].mxu0
    %v274 = vadd.f32 0.0, %v273
    %v275 = vpop.f32.mrb[0].mxu0
    %276 = vmatprep.mubr.bf16.mxu0 0
    %277 = vmatmul.mubr.bf16.gmra.mrb[0].mxu0 %v166
    %v278 = vpop.f32.mrb[0].mxu0
    %v279 = vadd.f32 0.0, %v278
    %v280 = vpop.f32.mrb[0].mxu0
    %v281 = vpop.f32.mrb[0].mxu0
    %v282 = vadd.f32 0.0, %v281
    %v283 = vpop.f32.mrb[0].mxu0
    %284 = vmatprep.mubr.bf16.mxu0 0
    %285 = vmatmul.mubr.bf16.gmra.mrb[0].mxu0 %v167
    %v286 = vpop.f32.mrb[0].mxu0
    %v287 = vadd.f32 0.0, %v286
    %v288 = vpop.f32.mrb[0].mxu0
    %v289 = vpop.f32.mrb[0].mxu0
    %v290 = vadd.f32 0.0, %v289
    %v291 = vpop.f32.mrb[0].mxu0
    %292 = vmatprep.mubr.bf16.mxu0 0
    %293 = vmatmul.mubr.bf16.gmra.mrb[0].mxu0 %v168
    %v294 = vpop.f32.mrb[0].mxu0
    %v295 = vadd.f32 0.0, %v294
    %v296 = vpop.f32.mrb[0].mxu0
    %v297 = vpop.f32.mrb[0].mxu0
    %v298 = vadd.f32 0.0, %v297
    %v299 = vpop.f32.mrb[0].mxu0
    %300 = vmatprep.mubr.bf16.mxu0 0
    %301 = vmatmul.mubr.bf16.gmra.mrb[0].mxu0 %v169
    %v302 = vpop.f32.mrb[0].mxu0
    %v303 = vadd.f32 0.0, %v302
    %v304 = vpop.f32.mrb[0].mxu0
    %v305 = vpop.f32.mrb[0].mxu0
    %v306 = vadd.f32 0.0, %v305
    %v307 = vpop.f32.mrb[0].mxu0
    %308 = vmatprep.mubr.bf16.mxu0 0
    %309 = vmatmul.mubr.bf16.gmra.mrb[0].mxu0 %v170
    %v310 = vpop.f32.mrb[0].mxu0
    %v311 = vadd.f32 0.0, %v310
    %v312 = vpop.f32.mrb[0].mxu0
    %v313 = vpop.f32.mrb[0].mxu0
    %v314 = vadd.f32 0.0, %v313
    %v315 = vpop.f32.mrb[0].mxu0
    %316 = vmatprep.mubr.bf16.mxu0 0
    %317 = vmatmul.mubr.bf16.gmra.mrb[0].mxu0 %v171
    %v318 = vpop.f32.mrb[0].mxu0
    %v319 = vadd.f32 0.0, %v318
    %v320 = vpop.f32.mrb[0].mxu0
    %v321 = vpop.f32.mrb[0].mxu0
    %v322 = vadd.f32 0.0, %v321
    %v323 = vpop.f32.mrb[0].mxu0
    %324 = vdwg.mxu0
    %v325 = vld [vmem:[%s2] sm:$0x1]
    %v327 = vlaneseq
    %v328 = vshrl.u32 %v327, 7
    %v329 = vsub.s32 0, %v328
    %v330 = vrot.slane %v325, %v329
    %v332 = vmul.f32 %v263, %v330
    %v333 = vmul.f32 %v266, %v330
    %v334 = vmul.f32 %v271, %v330
    %v335 = vmul.f32 %v274, %v330
    %v336 = vmul.f32 %v279, %v330
    %v337 = vmul.f32 %v282, %v330
    %v338 = vmul.f32 %v287, %v330
    %v339 = vmul.f32 %v290, %v330
    %v340 = vmul.f32 %v295, %v330
    %v341 = vmul.f32 %v298, %v330
    %v342 = vmul.f32 %v303, %v330
    %v343 = vmul.f32 %v306, %v330
    %v344 = vmul.f32 %v311, %v330
    %v345 = vmul.f32 %v314, %v330
    %v346 = vmul.f32 %v319, %v330
    %v347 = vmul.f32 %v322, %v330
    %v348 = vld [vmem:[%s3] sm:$0x1]
    %v350 = vlaneseq
    %v351 = vshrl.u32 %v350, 7
    %v352 = vsub.s32 0, %v351
    %v353 = vrot.slane %v348, %v352
    %v355 = vadd.f32 %v332, %v353
    %v356 = vadd.f32 %v333, %v353
    %v357 = vadd.f32 %v334, %v353
    %v358 = vadd.f32 %v335, %v353
    %v359 = vadd.f32 %v336, %v353
    %v360 = vadd.f32 %v337, %v353
    %v361 = vadd.f32 %v338, %v353
    %v362 = vadd.f32 %v339, %v353
    %v363 = vadd.f32 %v340, %v353
    %v364 = vadd.f32 %v341, %v353
    %v365 = vadd.f32 %v342, %v353
    %v366 = vadd.f32 %v343, %v353
    %v367 = vadd.f32 %v344, %v353
    %v368 = vadd.f32 %v345, %v353
    %v369 = vadd.f32 %v346, %v353
    %v370 = vadd.f32 %v347, %v353
    %v371 = vmax.f32 %v355, 0.0
    %v372 = vmax.f32 %v356, 0.0
    %v373 = vmax.f32 %v357, 0.0
    %v374 = vmax.f32 %v358, 0.0
    %v375 = vmax.f32 %v359, 0.0
    %v376 = vmax.f32 %v360, 0.0
    %v377 = vmax.f32 %v361, 0.0
    %v378 = vmax.f32 %v362, 0.0
    %v379 = vmax.f32 %v363, 0.0
    %v380 = vmax.f32 %v364, 0.0
    %v381 = vmax.f32 %v365, 0.0
    %v382 = vmax.f32 %v366, 0.0
    %v383 = vmax.f32 %v367, 0.0
    %v384 = vmax.f32 %v368, 0.0
    %v385 = vmax.f32 %v369, 0.0
    %v386 = vmax.f32 %v370, 0.0
    %v387 = vpack.c.bf16 %v371, %v371
    %v388 = vpack.c.bf16 %v372, %v372
    %v389 = vpack.c.bf16 %v373, %v373
    %v390 = vpack.c.bf16 %v374, %v374
    %v391 = vpack.c.bf16 %v375, %v375
    %v392 = vpack.c.bf16 %v376, %v376
    %v393 = vpack.c.bf16 %v377, %v377
    %v394 = vpack.c.bf16 %v378, %v378
    %v395 = vpack.c.bf16 %v379, %v379
    %v396 = vpack.c.bf16 %v380, %v380
    %v397 = vpack.c.bf16 %v381, %v381
    %v398 = vpack.c.bf16 %v382, %v382
    %v399 = vpack.c.bf16 %v383, %v383
    %v400 = vpack.c.bf16 %v384, %v384
    %v401 = vpack.c.bf16 %v385, %v385
    %v402 = vpack.c.bf16 %v386, %v386
    %s403 = scalar_lea.vmem [#allocation2], 8
    %404 = vst [vmem:[%s403] sm:$0xf] %v387
    %405 = vst [vmem:[%s403 + $0x4] sm:$0xf] %v388
    %406 = vst [vmem:[%s403 + $0x8] sm:$0xf] %v389
    %407 = vst [vmem:[%s403 + $0xc] sm:$0xf] %v390
    %408 = vst [vmem:[%s403 + $0x10] sm:$0xf] %v391
    %409 = vst [vmem:[%s403 + $0x14] sm:$0xf] %v392
    %410 = vst [vmem:[%s403 + $0x18] sm:$0xf] %v393
    %411 = vst [vmem:[%s403 + $0x1c] sm:$0xf] %v394
    %412 = vst [vmem:[%s403 + $0x20] sm:$0xf] %v395
    %413 = vst [vmem:[%s403 + $0x24] sm:$0xf] %v396
    %414 = vst [vmem:[%s403 + $0x28] sm:$0xf] %v397
    %415 = vst [vmem:[%s403 + $0x2c] sm:$0xf] %v398
    %416 = vst [vmem:[%s403 + $0x30] sm:$0xf] %v399
    %417 = vst [vmem:[%s403 + $0x34] sm:$0xf] %v400
    %418 = vst [vmem:[%s403 + $0x38] sm:$0xf] %v401
    %419 = vst [vmem:[%s403 + $0x3c] sm:$0xf] %v402
    %v420 = vld [vmem:[#allocation2] sm:$0xf]
    %v421 = vld [vmem:[#allocation2 + $0x4] sm:$0xf]
    %v422 = vld [vmem:[#allocation2 + $0x8] sm:$0xf]
    %v423 = vld [vmem:[#allocation2 + $0xc] sm:$0xf]
    %v424 = vld [vmem:[#allocation2 + $0x10] sm:$0xf]
    %v425 = vld [vmem:[#allocation2 + $0x14] sm:$0xf]
    %v426 = vld [vmem:[#allocation2 + $0x18] sm:$0xf]
    %v427 = vld [vmem:[#allocation2 + $0x1c] sm:$0xf]
    %v428 = vld [vmem:[#allocation2 + $0x20] sm:$0xf]
    %v429 = vld [vmem:[#allocation2 + $0x24] sm:$0xf]
    %v430 = vld [vmem:[#allocation2 + $0x28] sm:$0xf]
    %v431 = vld [vmem:[#allocation2 + $0x2c] sm:$0xf]
    %v432 = vld [vmem:[#allocation2 + $0x30] sm:$0xf]
    %v433 = vld [vmem:[#allocation2 + $0x34] sm:$0xf]
    %v434 = vld [vmem:[#allocation2 + $0x38] sm:$0xf]
    %v435 = vld [vmem:[#allocation2 + $0x3c] sm:$0xf]
    %s436 = scalar_lea.vmem [#allocation2], 4
    %v437 = vld [vmem:[%s436] sm:$0xf]
    %v438 = vld [vmem:[%s436 + $0x4] sm:$0xf]
    %v439 = vld [vmem:[%s436 + $0x8] sm:$0xf]
    %v440 = vld [vmem:[%s436 + $0xc] sm:$0xf]
    %v441 = vld [vmem:[%s436 + $0x10] sm:$0xf]
    %v442 = vld [vmem:[%s436 + $0x14] sm:$0xf]
    %v443 = vld [vmem:[%s436 + $0x18] sm:$0xf]
    %v444 = vld [vmem:[%s436 + $0x1c] sm:$0xf]
    %v445 = vld [vmem:[%s436 + $0x20] sm:$0xf]
    %v446 = vld [vmem:[%s436 + $0x24] sm:$0xf]
    %v447 = vld [vmem:[%s436 + $0x28] sm:$0xf]
    %v448 = vld [vmem:[%s436 + $0x2c] sm:$0xf]
    %v449 = vld [vmem:[%s436 + $0x30] sm:$0xf]
    %v450 = vld [vmem:[%s436 + $0x34] sm:$0xf]
    %v451 = vld [vmem:[%s436 + $0x38] sm:$0xf]
    %v452 = vld [vmem:[%s436 + $0x3c] sm:$0xf]
    %v453 = vld [vmem:[%s403] sm:$0xf]
    %v454 = vld [vmem:[%s403 + $0x4] sm:$0xf]
    %v455 = vld [vmem:[%s403 + $0x8] sm:$0xf]
    %v456 = vld [vmem:[%s403 + $0xc] sm:$0xf]
    %v457 = vld [vmem:[%s403 + $0x10] sm:$0xf]
    %v458 = vld [vmem:[%s403 + $0x14] sm:$0xf]
    %v459 = vld [vmem:[%s403 + $0x18] sm:$0xf]
    %v460 = vld [vmem:[%s403 + $0x1c] sm:$0xf]
    %v461 = vld [vmem:[%s403 + $0x20] sm:$0xf]
    %v462 = vld [vmem:[%s403 + $0x24] sm:$0xf]
    %v463 = vld [vmem:[%s403 + $0x28] sm:$0xf]
    %v464 = vld [vmem:[%s403 + $0x2c] sm:$0xf]
    %v465 = vld [vmem:[%s403 + $0x30] sm:$0xf]
    %v466 = vld [vmem:[%s403 + $0x34] sm:$0xf]
    %v467 = vld [vmem:[%s403 + $0x38] sm:$0xf]
    %v468 = vld [vmem:[%s403 + $0x3c] sm:$0xf]
    %s469 = scalar_lea.vmem [#allocation2], 12
    %v470 = vld [vmem:[%s469] sm:$0xf]
    %v471 = vld [vmem:[%s469 + $0x4] sm:$0xf]
    %v472 = vld [vmem:[%s469 + $0x8] sm:$0xf]
    %v473 = vld [vmem:[%s469 + $0xc] sm:$0xf]
    %v474 = vld [vmem:[%s469 + $0x10] sm:$0xf]
    %v475 = vld [vmem:[%s469 + $0x14] sm:$0xf]
    %v476 = vld [vmem:[%s469 + $0x18] sm:$0xf]
    %v477 = vld [vmem:[%s469 + $0x1c] sm:$0xf]
    %v478 = vld [vmem:[%s469 + $0x20] sm:$0xf]
    %v479 = vld [vmem:[%s469 + $0x24] sm:$0xf]
    %v480 = vld [vmem:[%s469 + $0x28] sm:$0xf]
    %v481 = vld [vmem:[%s469 + $0x2c] sm:$0xf]
    %v482 = vld [vmem:[%s469 + $0x30] sm:$0xf]
    %v483 = vld [vmem:[%s469 + $0x34] sm:$0xf]
    %v484 = vld [vmem:[%s469 + $0x38] sm:$0xf]
    %v485 = vld [vmem:[%s469 + $0x3c] sm:$0xf]
    %s486 = scalar_lea.vmem [#allocation2], 16
    %v487 = vld [vmem:[%s486] sm:$0xf]
    %v488 = vld [vmem:[%s486 + $0x4] sm:$0xf]
    %v489 = vld [vmem:[%s486 + $0x8] sm:$0xf]
    %v490 = vld [vmem:[%s486 + $0xc] sm:$0xf]
    %v491 = vld [vmem:[%s486 + $0x10] sm:$0xf]
    %v492 = vld [vmem:[%s486 + $0x14] sm:$0xf]
    %v493 = vld [vmem:[%s486 + $0x18] sm:$0xf]
    %v494 = vld [vmem:[%s486 + $0x1c] sm:$0xf]
    %v495 = vld [vmem:[%s486 + $0x20] sm:$0xf]
    %v496 = vld [vmem:[%s486 + $0x24] sm:$0xf]
    %v497 = vld [vmem:[%s486 + $0x28] sm:$0xf]
    %v498 = vld [vmem:[%s486 + $0x2c] sm:$0xf]
    %v499 = vld [vmem:[%s486 + $0x30] sm:$0xf]
    %v500 = vld [vmem:[%s486 + $0x34] sm:$0xf]
    %v501 = vld [vmem:[%s486 + $0x38] sm:$0xf]
    %v502 = vld [vmem:[%s486 + $0x3c] sm:$0xf]
    %v583 = vunpack.c.l.b16 %v420
    %v584 = vunpack.c.l.b16 %v437
    %v585 = vunpack.c.l.b16 %v453
    %v586 = vunpack.c.l.b16 %v470
    %v587 = vunpack.c.l.b16 %v487
    %v588 = vunpack.c.l.b16 %v421
    %v589 = vunpack.c.l.b16 %v438
    %v590 = vunpack.c.l.b16 %v454
    %v591 = vunpack.c.l.b16 %v471
    %v592 = vunpack.c.l.b16 %v488
    %v593 = vunpack.c.l.b16 %v422
    %v594 = vunpack.c.l.b16 %v439
    %v595 = vunpack.c.l.b16 %v455
    %v596 = vunpack.c.l.b16 %v472
    %v597 = vunpack.c.l.b16 %v489
    %v598 = vunpack.c.l.b16 %v423
    %v599 = vunpack.c.l.b16 %v440
    %v600 = vunpack.c.l.b16 %v456
    %v601 = vunpack.c.l.b16 %v473
    %v602 = vunpack.c.l.b16 %v490
    %v603 = vunpack.c.l.b16 %v424
    %v604 = vunpack.c.l.b16 %v441
    %v605 = vunpack.c.l.b16 %v457
    %v606 = vunpack.c.l.b16 %v474
    %v607 = vunpack.c.l.b16 %v491
    %v608 = vunpack.c.l.b16 %v425
    %v609 = vunpack.c.l.b16 %v442
    %v610 = vunpack.c.l.b16 %v458
    %v611 = vunpack.c.l.b16 %v475
    %v612 = vunpack.c.l.b16 %v492
    %v613 = vunpack.c.l.b16 %v426
    %v614 = vunpack.c.l.b16 %v443
    %v615 = vunpack.c.l.b16 %v459
    %v616 = vunpack.c.l.b16 %v476
    %v617 = vunpack.c.l.b16 %v493
    %v618 = vunpack.c.l.b16 %v427
    %v619 = vunpack.c.l.b16 %v444
    %v620 = vunpack.c.l.b16 %v460
    %v621 = vunpack.c.l.b16 %v477
    %v622 = vunpack.c.l.b16 %v494
    %v623 = vunpack.c.l.b16 %v428
    %v624 = vunpack.c.l.b16 %v445
    %v625 = vunpack.c.l.b16 %v461
    %v626 = vunpack.c.l.b16 %v478
    %v627 = vunpack.c.l.b16 %v495
    %v628 = vunpack.c.l.b16 %v429
    %v629 = vunpack.c.l.b16 %v446
    %v630 = vunpack.c.l.b16 %v462
    %v631 = vunpack.c.l.b16 %v479
    %v632 = vunpack.c.l.b16 %v496
    %v633 = vunpack.c.l.b16 %v430
    %v634 = vunpack.c.l.b16 %v447
    %v635 = vunpack.c.l.b16 %v463
    %v636 = vunpack.c.l.b16 %v480
    %v637 = vunpack.c.l.b16 %v497
    %v638 = vunpack.c.l.b16 %v431
    %v639 = vunpack.c.l.b16 %v448
    %v640 = vunpack.c.l.b16 %v464
    %v641 = vunpack.c.l.b16 %v481
    %v642 = vunpack.c.l.b16 %v498
    %v643 = vunpack.c.l.b16 %v432
    %v644 = vunpack.c.l.b16 %v449
    %v645 = vunpack.c.l.b16 %v465
    %v646 = vunpack.c.l.b16 %v482
    %v647 = vunpack.c.l.b16 %v499
    %v648 = vunpack.c.l.b16 %v433
    %v649 = vunpack.c.l.b16 %v450
    %v650 = vunpack.c.l.b16 %v466
    %v651 = vunpack.c.l.b16 %v483
    %v652 = vunpack.c.l.b16 %v500
    %v653 = vunpack.c.l.b16 %v434
    %v654 = vunpack.c.l.b16 %v451
    %v655 = vunpack.c.l.b16 %v467
    %v656 = vunpack.c.l.b16 %v484
    %v657 = vunpack.c.l.b16 %v501
    %v658 = vunpack.c.l.b16 %v435
    %v659 = vunpack.c.l.b16 %v452
    %v660 = vunpack.c.l.b16 %v468
    %v661 = vunpack.c.l.b16 %v485
    %v662 = vunpack.c.l.b16 %v502
    %v663 = vld [vmem:[#allocation9] sm:$0xff]
    %v664 = vld [vmem:[#allocation9 + $0x8] sm:$0xff]
    %v665 = vld [vmem:[#allocation9 + $0x10] sm:$0xff]
    %v666 = vld [vmem:[#allocation9 + $0x18] sm:$0xff]
    %v667 = vld [vmem:[#allocation9 + $0x20] sm:$0xff]
    %v668 = vld [vmem:[#allocation9 + $0x28] sm:$0xff]
    %v669 = vld [vmem:[#allocation9 + $0x30] sm:$0xff]
    %v670 = vld [vmem:[#allocation9 + $0x38] sm:$0xff]
    %v671 = vld [vmem:[#allocation9 + $0x40] sm:$0xff]
    %v672 = vld [vmem:[#allocation9 + $0x48] sm:$0xff]
    %v673 = vld [vmem:[#allocation9 + $0x50] sm:$0xff]
    %v674 = vld [vmem:[#allocation9 + $0x58] sm:$0xff]
    %v675 = vld [vmem:[#allocation9 + $0x60] sm:$0xff]
    %v676 = vld [vmem:[#allocation9 + $0x68] sm:$0xff]
    %v677 = vld [vmem:[#allocation9 + $0x70] sm:$0xff]
    %v678 = vld [vmem:[#allocation9 + $0x78] sm:$0xff]
    %v679 = vld [vmem:[#allocation9 + $0x80] sm:$0xff]
    %v680 = vld [vmem:[#allocation9 + $0x88] sm:$0xff]
    %v681 = vld [vmem:[#allocation9 + $0x90] sm:$0xff]
    %v682 = vld [vmem:[#allocation9 + $0x98] sm:$0xff]
    %v683 = vld [vmem:[#allocation9 + $0xa0] sm:$0xff]
    %v684 = vld [vmem:[#allocation9 + $0xa8] sm:$0xff]
    %v685 = vld [vmem:[#allocation9 + $0xb0] sm:$0xff]
    %v686 = vld [vmem:[#allocation9 + $0xb8] sm:$0xff]
    %v687 = vld [vmem:[#allocation9 + $0xc0] sm:$0xff]
    %v688 = vld [vmem:[#allocation9 + $0xc8] sm:$0xff]
    %v689 = vld [vmem:[#allocation9 + $0xd0] sm:$0xff]
    %v690 = vld [vmem:[#allocation9 + $0xd8] sm:$0xff]
    %v691 = vld [vmem:[#allocation9 + $0xe0] sm:$0xff]
    %v692 = vld [vmem:[#allocation9 + $0xe8] sm:$0xff]
    %v693 = vld [vmem:[#allocation9 + $0xf0] sm:$0xff]
    %v694 = vld [vmem:[#allocation9 + $0xf8] sm:$0xff]
    %v695 = vld [vmem:[#allocation9 + $0x100] sm:$0xff]
    %v696 = vld [vmem:[#allocation9 + $0x108] sm:$0xff]
    %v697 = vld [vmem:[#allocation9 + $0x110] sm:$0xff]
    %v698 = vld [vmem:[#allocation9 + $0x118] sm:$0xff]
    %v699 = vld [vmem:[#allocation9 + $0x120] sm:$0xff]
    %v700 = vld [vmem:[#allocation9 + $0x128] sm:$0xff]
    %v701 = vld [vmem:[#allocation9 + $0x130] sm:$0xff]
    %v702 = vld [vmem:[#allocation9 + $0x138] sm:$0xff]
    %v703 = vld [vmem:[#allocation9 + $0x140] sm:$0xff]
    %v704 = vld [vmem:[#allocation9 + $0x148] sm:$0xff]
    %v705 = vld [vmem:[#allocation9 + $0x150] sm:$0xff]
    %v706 = vld [vmem:[#allocation9 + $0x158] sm:$0xff]
    %v707 = vld [vmem:[#allocation9 + $0x160] sm:$0xff]
    %v708 = vld [vmem:[#allocation9 + $0x168] sm:$0xff]
    %v709 = vld [vmem:[#allocation9 + $0x170] sm:$0xff]
    %v710 = vld [vmem:[#allocation9 + $0x178] sm:$0xff]
    %v711 = vld [vmem:[#allocation9 + $0x180] sm:$0xff]
    %v712 = vld [vmem:[#allocation9 + $0x188] sm:$0xff]
    %v713 = vld [vmem:[#allocation9 + $0x190] sm:$0xff]
    %v714 = vld [vmem:[#allocation9 + $0x198] sm:$0xff]
    %v715 = vld [vmem:[#allocation9 + $0x1a0] sm:$0xff]
    %v716 = vld [vmem:[#allocation9 + $0x1a8] sm:$0xff]
    %v717 = vld [vmem:[#allocation9 + $0x1b0] sm:$0xff]
    %v718 = vld [vmem:[#allocation9 + $0x1b8] sm:$0xff]
    %v719 = vld [vmem:[#allocation9 + $0x1c0] sm:$0xff]
    %v720 = vld [vmem:[#allocation9 + $0x1c8] sm:$0xff]
    %v721 = vld [vmem:[#allocation9 + $0x1d0] sm:$0xff]
    %v722 = vld [vmem:[#allocation9 + $0x1d8] sm:$0xff]
    %v723 = vld [vmem:[#allocation9 + $0x1e0] sm:$0xff]
    %v724 = vld [vmem:[#allocation9 + $0x1e8] sm:$0xff]
    %v725 = vld [vmem:[#allocation9 + $0x1f0] sm:$0xff]
    %v726 = vld [vmem:[#allocation9 + $0x1f8] sm:$0xff]
    %v727 = vld [vmem:[#allocation9 + $0x200] sm:$0xff]
    %v728 = vld [vmem:[#allocation9 + $0x208] sm:$0xff]
    %v729 = vld [vmem:[#allocation9 + $0x210] sm:$0xff]
    %v730 = vld [vmem:[#allocation9 + $0x218] sm:$0xff]
    %v731 = vld [vmem:[#allocation9 + $0x220] sm:$0xff]
    %v732 = vld [vmem:[#allocation9 + $0x228] sm:$0xff]
    %v733 = vld [vmem:[#allocation9 + $0x230] sm:$0xff]
    %v734 = vld [vmem:[#allocation9 + $0x238] sm:$0xff]
    %v735 = vld [vmem:[#allocation9 + $0x240] sm:$0xff]
    %v736 = vld [vmem:[#allocation9 + $0x248] sm:$0xff]
    %v737 = vld [vmem:[#allocation9 + $0x250] sm:$0xff]
    %v738 = vld [vmem:[#allocation9 + $0x258] sm:$0xff]
    %v739 = vld [vmem:[#allocation9 + $0x260] sm:$0xff]
    %v740 = vld [vmem:[#allocation9 + $0x268] sm:$0xff]
    %v741 = vld [vmem:[#allocation9 + $0x270] sm:$0xff]
    %v742 = vld [vmem:[#allocation9 + $0x278] sm:$0xff]
    %v743 = vpack.c.b16 %v588, %v583
    %v744 = vpack.c.b16 %v589, %v584
    %v745 = vpack.c.b16 %v590, %v585
    %v746 = vpack.c.b16 %v591, %v586
    %v747 = vpack.c.b16 %v592, %v587
    %v748 = vpack.c.b16 %v598, %v593
    %v749 = vpack.c.b16 %v599, %v594
    %v750 = vpack.c.b16 %v600, %v595
    %v751 = vpack.c.b16 %v601, %v596
    %v752 = vpack.c.b16 %v602, %v597
    %v753 = vpack.c.b16 %v608, %v603
    %v754 = vpack.c.b16 %v609, %v604
    %v755 = vpack.c.b16 %v610, %v605
    %v756 = vpack.c.b16 %v611, %v606
    %v757 = vpack.c.b16 %v612, %v607
    %v758 = vpack.c.b16 %v618, %v613
    %v759 = vpack.c.b16 %v619, %v614
    %v760 = vpack.c.b16 %v620, %v615
    %v761 = vpack.c.b16 %v621, %v616
    %v762 = vpack.c.b16 %v622, %v617
    %v763 = vpack.c.b16 %v628, %v623
    %v764 = vpack.c.b16 %v629, %v624
    %v765 = vpack.c.b16 %v630, %v625
    %v766 = vpack.c.b16 %v631, %v626
    %v767 = vpack.c.b16 %v632, %v627
    %v768 = vpack.c.b16 %v638, %v633
    %v769 = vpack.c.b16 %v639, %v634
    %v770 = vpack.c.b16 %v640, %v635
    %v771 = vpack.c.b16 %v641, %v636
    %v772 = vpack.c.b16 %v642, %v637
    %v773 = vpack.c.b16 %v648, %v643
    %v774 = vpack.c.b16 %v649, %v644
    %v775 = vpack.c.b16 %v650, %v645
    %v776 = vpack.c.b16 %v651, %v646
    %v777 = vpack.c.b16 %v652, %v647
    %v778 = vpack.c.b16 %v658, %v653
    %v779 = vpack.c.b16 %v659, %v654
    %v780 = vpack.c.b16 %v660, %v655
    %v781 = vpack.c.b16 %v661, %v656
    %v782 = vpack.c.b16 %v662, %v657
    %v903 = vunpack.c.l.b16 %v663
    %v904 = vunpack.c.h.b16 %v663
    %v905 = vunpack.c.l.b16 %v664
    %v906 = vunpack.c.h.b16 %v664
    %v907 = vunpack.c.l.b16 %v665
    %v908 = vunpack.c.h.b16 %v665
    %v909 = vunpack.c.l.b16 %v666
    %v910 = vunpack.c.h.b16 %v666
    %v911 = vunpack.c.l.b16 %v667
    %v912 = vunpack.c.h.b16 %v667
    %v913 = vunpack.c.l.b16 %v668
    %v914 = vunpack.c.h.b16 %v668
    %v915 = vunpack.c.l.b16 %v669
    %v916 = vunpack.c.h.b16 %v669
    %v917 = vunpack.c.l.b16 %v670
    %v918 = vunpack.c.h.b16 %v670
    %v919 = vunpack.c.l.b16 %v671
    %v920 = vunpack.c.h.b16 %v671
    %v921 = vunpack.c.l.b16 %v672
    %v922 = vunpack.c.h.b16 %v672
    %v923 = vunpack.c.l.b16 %v673
    %v924 = vunpack.c.h.b16 %v673
    %v925 = vunpack.c.l.b16 %v674
    %v926 = vunpack.c.h.b16 %v674
    %v927 = vunpack.c.l.b16 %v675
    %v928 = vunpack.c.h.b16 %v675
    %v929 = vunpack.c.l.b16 %v676
    %v930 = vunpack.c.h.b16 %v676
    %v931 = vunpack.c.l.b16 %v677
    %v932 = vunpack.c.h.b16 %v677
    %v933 = vunpack.c.l.b16 %v678
    %v934 = vunpack.c.h.b16 %v678
    %v935 = vunpack.c.l.b16 %v679
    %v936 = vunpack.c.h.b16 %v679
    %v937 = vunpack.c.l.b16 %v680
    %v938 = vunpack.c.h.b16 %v680
    %v939 = vunpack.c.l.b16 %v681
    %v940 = vunpack.c.h.b16 %v681
    %v941 = vunpack.c.l.b16 %v682
    %v942 = vunpack.c.h.b16 %v682
    %v943 = vunpack.c.l.b16 %v683
    %v944 = vunpack.c.h.b16 %v683
    %v945 = vunpack.c.l.b16 %v684
    %v946 = vunpack.c.h.b16 %v684
    %v947 = vunpack.c.l.b16 %v685
    %v948 = vunpack.c.h.b16 %v685
    %v949 = vunpack.c.l.b16 %v686
    %v950 = vunpack.c.h.b16 %v686
    %v951 = vunpack.c.l.b16 %v687
    %v952 = vunpack.c.h.b16 %v687
    %v953 = vunpack.c.l.b16 %v688
    %v954 = vunpack.c.h.b16 %v688
    %v955 = vunpack.c.l.b16 %v689
    %v956 = vunpack.c.h.b16 %v689
    %v957 = vunpack.c.l.b16 %v690
    %v958 = vunpack.c.h.b16 %v690
    %v959 = vunpack.c.l.b16 %v691
    %v960 = vunpack.c.h.b16 %v691
    %v961 = vunpack.c.l.b16 %v692
    %v962 = vunpack.c.h.b16 %v692
    %v963 = vunpack.c.l.b16 %v693
    %v964 = vunpack.c.h.b16 %v693
    %v965 = vunpack.c.l.b16 %v694
    %v966 = vunpack.c.h.b16 %v694
    %v967 = vunpack.c.l.b16 %v695
    %v968 = vunpack.c.h.b16 %v695
    %v969 = vunpack.c.l.b16 %v696
    %v970 = vunpack.c.h.b16 %v696
    %v971 = vunpack.c.l.b16 %v697
    %v972 = vunpack.c.h.b16 %v697
    %v973 = vunpack.c.l.b16 %v698
    %v974 = vunpack.c.h.b16 %v698
    %v975 = vunpack.c.l.b16 %v699
    %v976 = vunpack.c.h.b16 %v699
    %v977 = vunpack.c.l.b16 %v700
    %v978 = vunpack.c.h.b16 %v700
    %v979 = vunpack.c.l.b16 %v701
    %v980 = vunpack.c.h.b16 %v701
    %v981 = vunpack.c.l.b16 %v702
    %v982 = vunpack.c.h.b16 %v702
    %v983 = vunpack.c.l.b16 %v703
    %v984 = vunpack.c.h.b16 %v703
    %v985 = vunpack.c.l.b16 %v704
    %v986 = vunpack.c.h.b16 %v704
    %v987 = vunpack.c.l.b16 %v705
    %v988 = vunpack.c.h.b16 %v705
    %v989 = vunpack.c.l.b16 %v706
    %v990 = vunpack.c.h.b16 %v706
    %v991 = vunpack.c.l.b16 %v707
    %v992 = vunpack.c.h.b16 %v707
    %v993 = vunpack.c.l.b16 %v708
    %v994 = vunpack.c.h.b16 %v708
    %v995 = vunpack.c.l.b16 %v709
    %v996 = vunpack.c.h.b16 %v709
    %v997 = vunpack.c.l.b16 %v710
    %v998 = vunpack.c.h.b16 %v710
    %v999 = vunpack.c.l.b16 %v711
    %v1000 = vunpack.c.h.b16 %v711
    %v1001 = vunpack.c.l.b16 %v712
    %v1002 = vunpack.c.h.b16 %v712
    %v1003 = vunpack.c.l.b16 %v713
    %v1004 = vunpack.c.h.b16 %v713
    %v1005 = vunpack.c.l.b16 %v714
    %v1006 = vunpack.c.h.b16 %v714
    %v1007 = vunpack.c.l.b16 %v715
    %v1008 = vunpack.c.h.b16 %v715
    %v1009 = vunpack.c.l.b16 %v716
    %v1010 = vunpack.c.h.b16 %v716
    %v1011 = vunpack.c.l.b16 %v717
    %v1012 = vunpack.c.h.b16 %v717
    %v1013 = vunpack.c.l.b16 %v718
    %v1014 = vunpack.c.h.b16 %v718
    %v1015 = vunpack.c.l.b16 %v719
    %v1016 = vunpack.c.h.b16 %v719
    %v1017 = vunpack.c.l.b16 %v720
    %v1018 = vunpack.c.h.b16 %v720
    %v1019 = vunpack.c.l.b16 %v721
    %v1020 = vunpack.c.h.b16 %v721
    %v1021 = vunpack.c.l.b16 %v722
    %v1022 = vunpack.c.h.b16 %v722
    %v1023 = vunpack.c.l.b16 %v723
    %v1024 = vunpack.c.h.b16 %v723
    %v1025 = vunpack.c.l.b16 %v724
    %v1026 = vunpack.c.h.b16 %v724
    %v1027 = vunpack.c.l.b16 %v725
    %v1028 = vunpack.c.h.b16 %v725
    %v1029 = vunpack.c.l.b16 %v726
    %v1030 = vunpack.c.h.b16 %v726
    %v1031 = vunpack.c.l.b16 %v727
    %v1032 = vunpack.c.h.b16 %v727
    %v1033 = vunpack.c.l.b16 %v728
    %v1034 = vunpack.c.h.b16 %v728
    %v1035 = vunpack.c.l.b16 %v729
    %v1036 = vunpack.c.h.b16 %v729
    %v1037 = vunpack.c.l.b16 %v730
    %v1038 = vunpack.c.h.b16 %v730
    %v1039 = vunpack.c.l.b16 %v731
    %v1040 = vunpack.c.h.b16 %v731
    %v1041 = vunpack.c.l.b16 %v732
    %v1042 = vunpack.c.h.b16 %v732
    %v1043 = vunpack.c.l.b16 %v733
    %v1044 = vunpack.c.h.b16 %v733
    %v1045 = vunpack.c.l.b16 %v734
    %v1046 = vunpack.c.h.b16 %v734
    %v1047 = vunpack.c.l.b16 %v735
    %v1048 = vunpack.c.h.b16 %v735
    %v1049 = vunpack.c.l.b16 %v736
    %v1050 = vunpack.c.h.b16 %v736
    %v1051 = vunpack.c.l.b16 %v737
    %v1052 = vunpack.c.h.b16 %v737
    %v1053 = vunpack.c.l.b16 %v738
    %v1054 = vunpack.c.h.b16 %v738
    %v1055 = vunpack.c.l.b16 %v739
    %v1056 = vunpack.c.h.b16 %v739
    %v1057 = vunpack.c.l.b16 %v740
    %v1058 = vunpack.c.h.b16 %v740
    %v1059 = vunpack.c.l.b16 %v741
    %v1060 = vunpack.c.h.b16 %v741
    %v1061 = vunpack.c.l.b16 %v742
    %v1062 = vunpack.c.h.b16 %v742
    %v1063 = vpack.c.b16 %v905, %v903
    %v1064 = vpack.c.b16 %v906, %v904
    %v1065 = vpack.c.b16 %v909, %v907
    %v1066 = vpack.c.b16 %v910, %v908
    %v1067 = vpack.c.b16 %v913, %v911
    %v1068 = vpack.c.b16 %v914, %v912
    %v1069 = vpack.c.b16 %v917, %v915
    %v1070 = vpack.c.b16 %v918, %v916
    %v1071 = vpack.c.b16 %v921, %v919
    %v1072 = vpack.c.b16 %v922, %v920
    %v1073 = vpack.c.b16 %v925, %v923
    %v1074 = vpack.c.b16 %v926, %v924
    %v1075 = vpack.c.b16 %v929, %v927
    %v1076 = vpack.c.b16 %v930, %v928
    %v1077 = vpack.c.b16 %v933, %v931
    %v1078 = vpack.c.b16 %v934, %v932
    %v1079 = vpack.c.b16 %v937, %v935
    %v1080 = vpack.c.b16 %v938, %v936
    %v1081 = vpack.c.b16 %v941, %v939
    %v1082 = vpack.c.b16 %v942, %v940
    %v1083 = vpack.c.b16 %v945, %v943
    %v1084 = vpack.c.b16 %v946, %v944
    %v1085 = vpack.c.b16 %v949, %v947
    %v1086 = vpack.c.b16 %v950, %v948
    %v1087 = vpack.c.b16 %v953, %v951
    %v1088 = vpack.c.b16 %v954, %v952
    %v1089 = vpack.c.b16 %v957, %v955
    %v1090 = vpack.c.b16 %v958, %v956
    %v1091 = vpack.c.b16 %v961, %v959
    %v1092 = vpack.c.b16 %v962, %v960
    %v1093 = vpack.c.b16 %v965, %v963
    %v1094 = vpack.c.b16 %v966, %v964
    %v1095 = vpack.c.b16 %v969, %v967
    %v1096 = vpack.c.b16 %v970, %v968
    %v1097 = vpack.c.b16 %v973, %v971
    %v1098 = vpack.c.b16 %v974, %v972
    %v1099 = vpack.c.b16 %v977, %v975
    %v1100 = vpack.c.b16 %v978, %v976
    %v1101 = vpack.c.b16 %v981, %v979
    %v1102 = vpack.c.b16 %v982, %v980
    %v1103 = vpack.c.b16 %v985, %v983
    %v1104 = vpack.c.b16 %v986, %v984
    %v1105 = vpack.c.b16 %v989, %v987
    %v1106 = vpack.c.b16 %v990, %v988
    %v1107 = vpack.c.b16 %v993, %v991
    %v1108 = vpack.c.b16 %v994, %v992
    %v1109 = vpack.c.b16 %v997, %v995
    %v1110 = vpack.c.b16 %v998, %v996
    %v1111 = vpack.c.b16 %v1001, %v999
    %v1112 = vpack.c.b16 %v1002, %v1000
    %v1113 = vpack.c.b16 %v1005, %v1003
    %v1114 = vpack.c.b16 %v1006, %v1004
    %v1115 = vpack.c.b16 %v1009, %v1007
    %v1116 = vpack.c.b16 %v1010, %v1008
    %v1117 = vpack.c.b16 %v1013, %v1011
    %v1118 = vpack.c.b16 %v1014, %v1012
    %v1119 = vpack.c.b16 %v1017, %v1015
    %v1120 = vpack.c.b16 %v1018, %v1016
    %v1121 = vpack.c.b16 %v1021, %v1019
    %v1122 = vpack.c.b16 %v1022, %v1020
    %v1123 = vpack.c.b16 %v1025, %v1023
    %v1124 = vpack.c.b16 %v1026, %v1024
    %v1125 = vpack.c.b16 %v1029, %v1027
    %v1126 = vpack.c.b16 %v1030, %v1028
    %v1127 = vpack.c.b16 %v1033, %v1031
    %v1128 = vpack.c.b16 %v1034, %v1032
    %v1129 = vpack.c.b16 %v1037, %v1035
    %v1130 = vpack.c.b16 %v1038, %v1036
    %v1131 = vpack.c.b16 %v1041, %v1039
    %v1132 = vpack.c.b16 %v1042, %v1040
    %v1133 = vpack.c.b16 %v1045, %v1043
    %v1134 = vpack.c.b16 %v1046, %v1044
    %v1135 = vpack.c.b16 %v1049, %v1047
    %v1136 = vpack.c.b16 %v1050, %v1048
    %v1137 = vpack.c.b16 %v1053, %v1051
    %v1138 = vpack.c.b16 %v1054, %v1052
    %v1139 = vpack.c.b16 %v1057, %v1055
    %v1140 = vpack.c.b16 %v1058, %v1056
    %v1141 = vpack.c.b16 %v1061, %v1059
    %v1142 = vpack.c.b16 %v1062, %v1060
    %1223 = vmatprep.subr.bf16.mxu0 %v1064
    %1224 = vmatpush1.bf16.msra.mxu0 %v1063
    %1225 = vmatprep.subr.bf16.mxu0 %v1066
    %1226 = vmatpush1.bf16.msra.mxu0 %v1065
    %1227 = vmatprep.subr.bf16.mxu0 %v1068
    %1228 = vmatpush1.bf16.msra.mxu0 %v1067
    %1229 = vmatprep.subr.bf16.mxu0 %v1070
    %1230 = vmatpush1.bf16.msra.mxu0 %v1069
    %1231 = vmatprep.subr.bf16.mxu0 %v1072
    %1232 = vmatpush1.bf16.msra.mxu0 %v1071
    %1233 = vmatprep.subr.bf16.mxu0 %v1074
    %1234 = vmatpush1.bf16.msra.mxu0 %v1073
    %1235 = vmatprep.subr.bf16.mxu0 %v1076
    %1236 = vmatpush1.bf16.msra.mxu0 %v1075
    %1237 = vmatprep.subr.bf16.mxu0 %v1078
    %1238 = vmatpush1.bf16.msra.mxu0 %v1077
    %1239 = vmatprep.subr.bf16.mxu0 %v1080
    %1240 = vmatpush1.bf16.msra.mxu0 %v1079
    %1241 = vmatprep.subr.bf16.mxu0 %v1082
    %1242 = vmatpush1.bf16.msra.mxu0 %v1081
    %1243 = vmatprep.subr.bf16.mxu0 %v1084
    %1244 = vmatpush1.bf16.msra.mxu0 %v1083
    %1245 = vmatprep.subr.bf16.mxu0 %v1086
    %1246 = vmatpush1.bf16.msra.mxu0 %v1085
    %1247 = vmatprep.subr.bf16.mxu0 %v1088
    %1248 = vmatpush1.bf16.msra.mxu0 %v1087
    %1249 = vmatprep.subr.bf16.mxu0 %v1090
    %1250 = vmatpush1.bf16.msra.mxu0 %v1089
    %1251 = vmatprep.subr.bf16.mxu0 %v1092
    %1252 = vmatpush1.bf16.msra.mxu0 %v1091
    %1253 = vmatprep.subr.bf16.mxu0 %v1094
    %1254 = vmatpush1.bf16.msra.mxu0 %v1093
    %1255 = vmatprep.mubr.bf16.mxu0 %v744
    %1256 = vmatmul.mubr.bf16.gmra.mrb[0].mxu0 %v743
    %v1257 = vpop.f32.mrb[0].mxu0
    %v1258 = vadd.f32 0.0, %v1257
    %v1259 = vpop.f32.mrb[0].mxu0
    %v1260 = vadd.f32 0.0, %v1259
    %v1261 = vpop.f32.mrb[0].mxu0
    %v1262 = vadd.f32 0.0, %v1261
    %v1263 = vpop.f32.mrb[0].mxu0
    %v1264 = vadd.f32 0.0, %v1263
    %1265 = vmatprep.mubr.bf16.mxu0 %v749
    %1266 = vmatmul.mubr.bf16.gmra.mrb[0].mxu0 %v748
    %v1267 = vpop.f32.mrb[0].mxu0
    %v1268 = vadd.f32 0.0, %v1267
    %v1269 = vpop.f32.mrb[0].mxu0
    %v1270 = vadd.f32 0.0, %v1269
    %v1271 = vpop.f32.mrb[0].mxu0
    %v1272 = vadd.f32 0.0, %v1271
    %v1273 = vpop.f32.mrb[0].mxu0
    %v1274 = vadd.f32 0.0, %v1273
    %1275 = vmatprep.mubr.bf16.mxu0 %v754
    %1276 = vmatmul.mubr.bf16.gmra.mrb[0].mxu0 %v753
    %v1277 = vpop.f32.mrb[0].mxu0
    %v1278 = vadd.f32 0.0, %v1277
    %v1279 = vpop.f32.mrb[0].mxu0
    %v1280 = vadd.f32 0.0, %v1279
    %v1281 = vpop.f32.mrb[0].mxu0
    %v1282 = vadd.f32 0.0, %v1281
    %v1283 = vpop.f32.mrb[0].mxu0
    %v1284 = vadd.f32 0.0, %v1283
    %1285 = vmatprep.mubr.bf16.mxu0 %v759
    %1286 = vmatmul.mubr.bf16.gmra.mrb[0].mxu0 %v758
    %v1287 = vpop.f32.mrb[0].mxu0
    %v1288 = vadd.f32 0.0, %v1287
    %v1289 = vpop.f32.mrb[0].mxu0
    %v1290 = vadd.f32 0.0, %v1289
    %v1291 = vpop.f32.mrb[0].mxu0
    %v1292 = vadd.f32 0.0, %v1291
    %v1293 = vpop.f32.mrb[0].mxu0
    %v1294 = vadd.f32 0.0, %v1293
    %1295 = vmatprep.mubr.bf16.mxu0 %v764
    %1296 = vmatmul.mubr.bf16.gmra.mrb[0].mxu0 %v763
    %v1297 = vpop.f32.mrb[0].mxu0
    %v1298 = vadd.f32 0.0, %v1297
    %v1299 = vpop.f32.mrb[0].mxu0
    %v1300 = vadd.f32 0.0, %v1299
    %v1301 = vpop.f32.mrb[0].mxu0
    %v1302 = vadd.f32 0.0, %v1301
    %v1303 = vpop.f32.mrb[0].mxu0
    %v1304 = vadd.f32 0.0, %v1303
    %1305 = vmatprep.mubr.bf16.mxu0 %v769
    %1306 = vmatmul.mubr.bf16.gmra.mrb[0].mxu0 %v768
    %v1307 = vpop.f32.mrb[0].mxu0
    %v1308 = vadd.f32 0.0, %v1307
    %v1309 = vpop.f32.mrb[0].mxu0
    %v1310 = vadd.f32 0.0, %v1309
    %v1311 = vpop.f32.mrb[0].mxu0
    %v1312 = vadd.f32 0.0, %v1311
    %v1313 = vpop.f32.mrb[0].mxu0
    %v1314 = vadd.f32 0.0, %v1313
    %1315 = vmatprep.mubr.bf16.mxu0 %v774
    %1316 = vmatmul.mubr.bf16.gmra.mrb[0].mxu0 %v773
    %v1317 = vpop.f32.mrb[0].mxu0
    %v1318 = vadd.f32 0.0, %v1317
    %v1319 = vpop.f32.mrb[0].mxu0
    %v1320 = vadd.f32 0.0, %v1319
    %v1321 = vpop.f32.mrb[0].mxu0
    %v1322 = vadd.f32 0.0, %v1321
    %v1323 = vpop.f32.mrb[0].mxu0
    %v1324 = vadd.f32 0.0, %v1323
    %1325 = vmatprep.mubr.bf16.mxu0 %v779
    %1326 = vmatmul.mubr.bf16.gmra.mrb[0].mxu0 %v778
    %v1327 = vpop.f32.mrb[0].mxu0
    %v1328 = vadd.f32 0.0, %v1327
    %v1329 = vpop.f32.mrb[0].mxu0
    %v1330 = vadd.f32 0.0, %v1329
    %v1331 = vpop.f32.mrb[0].mxu0
    %v1332 = vadd.f32 0.0, %v1331
    %v1333 = vpop.f32.mrb[0].mxu0
    %v1334 = vadd.f32 0.0, %v1333
    %1335 = vdwg.mxu0
    %1336 = vmatprep.subr.bf16.mxu0 %v1096
    %1337 = vmatpush1.bf16.msra.mxu0 %v1095
    %1338 = vmatprep.subr.bf16.mxu0 %v1098
    %1339 = vmatpush1.bf16.msra.mxu0 %v1097
    %1340 = vmatprep.subr.bf16.mxu0 %v1100
    %1341 = vmatpush1.bf16.msra.mxu0 %v1099
    %1342 = vmatprep.subr.bf16.mxu0 %v1102
    %1343 = vmatpush1.bf16.msra.mxu0 %v1101
    %1344 = vmatprep.subr.bf16.mxu0 %v1104
    %1345 = vmatpush1.bf16.msra.mxu0 %v1103
    %1346 = vmatprep.subr.bf16.mxu0 %v1106
    %1347 = vmatpush1.bf16.msra.mxu0 %v1105
    %1348 = vmatprep.subr.bf16.mxu0 %v1108
    %1349 = vmatpush1.bf16.msra.mxu0 %v1107
    %1350 = vmatprep.subr.bf16.mxu0 %v1110
    %1351 = vmatpush1.bf16.msra.mxu0 %v1109
    %1352 = vmatprep.subr.bf16.mxu0 %v1112
    %1353 = vmatpush1.bf16.msra.mxu0 %v1111
    %1354 = vmatprep.subr.bf16.mxu0 %v1114
    %1355 = vmatpush1.bf16.msra.mxu0 %v1113
    %1356 = vmatprep.subr.bf16.mxu0 %v1116
    %1357 = vmatpush1.bf16.msra.mxu0 %v1115
    %1358 = vmatprep.subr.bf16.mxu0 %v1118
    %1359 = vmatpush1.bf16.msra.mxu0 %v1117
    %1360 = vmatprep.subr.bf16.mxu0 %v1120
    %1361 = vmatpush1.bf16.msra.mxu0 %v1119
    %1362 = vmatprep.subr.bf16.mxu0 %v1122
    %1363 = vmatpush1.bf16.msra.mxu0 %v1121
    %1364 = vmatprep.subr.bf16.mxu0 %v1124
    %1365 = vmatpush1.bf16.msra.mxu0 %v1123
    %1366 = vmatprep.subr.bf16.mxu0 %v1126
    %1367 = vmatpush1.bf16.msra.mxu0 %v1125
    %1368 = vmatprep.mubr.bf16.mxu0 %v746
    %1369 = vmatmul.mubr.bf16.gmra.mrb[0].mxu0 %v745
    %v1370 = vpop.f32.mrb[0].mxu0
    %v1371 = vadd.f32 %v1258, %v1370
    %v1372 = vpop.f32.mrb[0].mxu0
    %v1373 = vadd.f32 %v1260, %v1372
    %v1374 = vpop.f32.mrb[0].mxu0
    %v1375 = vadd.f32 %v1262, %v1374
    %v1376 = vpop.f32.mrb[0].mxu0
    %v1377 = vadd.f32 %v1264, %v1376
    %1378 = vmatprep.mubr.bf16.mxu0 %v751
    %1379 = vmatmul.mubr.bf16.gmra.mrb[0].mxu0 %v750
    %v1380 = vpop.f32.mrb[0].mxu0
    %v1381 = vadd.f32 %v1268, %v1380
    %v1382 = vpop.f32.mrb[0].mxu0
    %v1383 = vadd.f32 %v1270, %v1382
    %v1384 = vpop.f32.mrb[0].mxu0
    %v1385 = vadd.f32 %v1272, %v1384
    %v1386 = vpop.f32.mrb[0].mxu0
    %v1387 = vadd.f32 %v1274, %v1386
    %1388 = vmatprep.mubr.bf16.mxu0 %v756
    %1389 = vmatmul.mubr.bf16.gmra.mrb[0].mxu0 %v755
    %v1390 = vpop.f32.mrb[0].mxu0
    %v1391 = vadd.f32 %v1278, %v1390
    %v1392 = vpop.f32.mrb[0].mxu0
    %v1393 = vadd.f32 %v1280, %v1392
    %v1394 = vpop.f32.mrb[0].mxu0
    %v1395 = vadd.f32 %v1282, %v1394
    %v1396 = vpop.f32.mrb[0].mxu0
    %v1397 = vadd.f32 %v1284, %v1396
    %1398 = vmatprep.mubr.bf16.mxu0 %v761
    %1399 = vmatmul.mubr.bf16.gmra.mrb[0].mxu0 %v760
    %v1400 = vpop.f32.mrb[0].mxu0
    %v1401 = vadd.f32 %v1288, %v1400
    %v1402 = vpop.f32.mrb[0].mxu0
    %v1403 = vadd.f32 %v1290, %v1402
    %v1404 = vpop.f32.mrb[0].mxu0
    %v1405 = vadd.f32 %v1292, %v1404
    %v1406 = vpop.f32.mrb[0].mxu0
    %v1407 = vadd.f32 %v1294, %v1406
    %1408 = vmatprep.mubr.bf16.mxu0 %v766
    %1409 = vmatmul.mubr.bf16.gmra.mrb[0].mxu0 %v765
    %v1410 = vpop.f32.mrb[0].mxu0
    %v1411 = vadd.f32 %v1298, %v1410
    %v1412 = vpop.f32.mrb[0].mxu0
    %v1413 = vadd.f32 %v1300, %v1412
    %v1414 = vpop.f32.mrb[0].mxu0
    %v1415 = vadd.f32 %v1302, %v1414
    %v1416 = vpop.f32.mrb[0].mxu0
    %v1417 = vadd.f32 %v1304, %v1416
    %1418 = vmatprep.mubr.bf16.mxu0 %v771
    %1419 = vmatmul.mubr.bf16.gmra.mrb[0].mxu0 %v770
    %v1420 = vpop.f32.mrb[0].mxu0
    %v1421 = vadd.f32 %v1308, %v1420
    %v1422 = vpop.f32.mrb[0].mxu0
    %v1423 = vadd.f32 %v1310, %v1422
    %v1424 = vpop.f32.mrb[0].mxu0
    %v1425 = vadd.f32 %v1312, %v1424
    %v1426 = vpop.f32.mrb[0].mxu0
    %v1427 = vadd.f32 %v1314, %v1426
    %1428 = vmatprep.mubr.bf16.mxu0 %v776
    %1429 = vmatmul.mubr.bf16.gmra.mrb[0].mxu0 %v775
    %v1430 = vpop.f32.mrb[0].mxu0
    %v1431 = vadd.f32 %v1318, %v1430
    %v1432 = vpop.f32.mrb[0].mxu0
    %v1433 = vadd.f32 %v1320, %v1432
    %v1434 = vpop.f32.mrb[0].mxu0
    %v1435 = vadd.f32 %v1322, %v1434
    %v1436 = vpop.f32.mrb[0].mxu0
    %v1437 = vadd.f32 %v1324, %v1436
    %1438 = vmatprep.mubr.bf16.mxu0 %v781
    %1439 = vmatmul.mubr.bf16.gmra.mrb[0].mxu0 %v780
    %v1440 = vpop.f32.mrb[0].mxu0
    %v1441 = vadd.f32 %v1328, %v1440
    %v1442 = vpop.f32.mrb[0].mxu0
    %v1443 = vadd.f32 %v1330, %v1442
    %v1444 = vpop.f32.mrb[0].mxu0
    %v1445 = vadd.f32 %v1332, %v1444
    %v1446 = vpop.f32.mrb[0].mxu0
    %v1447 = vadd.f32 %v1334, %v1446
    %1448 = vdwg.mxu0
    %1449 = vmatprep.subr.bf16.mxu0 %v1128
    %1450 = vmatpush1.bf16.msra.mxu0 %v1127
    %1451 = vmatprep.subr.bf16.mxu0 %v1130
    %1452 = vmatpush1.bf16.msra.mxu0 %v1129
    %1453 = vmatprep.subr.bf16.mxu0 %v1132
    %1454 = vmatpush1.bf16.msra.mxu0 %v1131
    %1455 = vmatprep.subr.bf16.mxu0 %v1134
    %1456 = vmatpush1.bf16.msra.mxu0 %v1133
    %1457 = vmatprep.subr.bf16.mxu0 %v1136
    %1458 = vmatpush1.bf16.msra.mxu0 %v1135
    %1459 = vmatprep.subr.bf16.mxu0 %v1138
    %1460 = vmatpush1.bf16.msra.mxu0 %v1137
    %1461 = vmatprep.subr.bf16.mxu0 %v1140
    %1462 = vmatpush1.bf16.msra.mxu0 %v1139
    %1463 = vmatprep.subr.bf16.mxu0 %v1142
    %1464 = vmatpush1.bf16.msra.mxu0 %v1141
    %1465 = vmatprep.subr.bf16.mxu0 0
    %1466 = vmatpush1.bf16.msra.mxu0 0
    %1467 = vmatprep.subr.bf16.mxu0 0
    %1468 = vmatpush1.bf16.msra.mxu0 0
    %1469 = vmatprep.subr.bf16.mxu0 0
    %1470 = vmatpush1.bf16.msra.mxu0 0
    %1471 = vmatprep.subr.bf16.mxu0 0
    %1472 = vmatpush1.bf16.msra.mxu0 0
    %1473 = vmatprep.subr.bf16.mxu0 0
    %1474 = vmatpush1.bf16.msra.mxu0 0
    %1475 = vmatprep.subr.bf16.mxu0 0
    %1476 = vmatpush1.bf16.msra.mxu0 0
    %1477 = vmatprep.subr.bf16.mxu0 0
    %1478 = vmatpush1.bf16.msra.mxu0 0
    %1479 = vmatprep.subr.bf16.mxu0 0
    %1480 = vmatpush1.bf16.msra.mxu0 0
    %1481 = vmatprep.mubr.bf16.mxu0 0
    %1482 = vmatmul.mubr.bf16.gmra.mrb[0].mxu0 %v747
    %v1483 = vpop.f32.mrb[0].mxu0
    %v1484 = vadd.f32 %v1371, %v1483
    %v1485 = vpop.f32.mrb[0].mxu0
    %v1486 = vadd.f32 %v1373, %v1485
    %v1487 = vpop.f32.mrb[0].mxu0
    %v1488 = vadd.f32 %v1375, %v1487
    %v1489 = vpop.f32.mrb[0].mxu0
    %v1490 = vadd.f32 %v1377, %v1489
    %1491 = vmatprep.mubr.bf16.mxu0 0
    %1492 = vmatmul.mubr.bf16.gmra.mrb[0].mxu0 %v752
    %v1493 = vpop.f32.mrb[0].mxu0
    %v1494 = vadd.f32 %v1381, %v1493
    %v1495 = vpop.f32.mrb[0].mxu0
    %v1496 = vadd.f32 %v1383, %v1495
    %v1497 = vpop.f32.mrb[0].mxu0
    %v1498 = vadd.f32 %v1385, %v1497
    %v1499 = vpop.f32.mrb[0].mxu0
    %v1500 = vadd.f32 %v1387, %v1499
    %1501 = vmatprep.mubr.bf16.mxu0 0
    %1502 = vmatmul.mubr.bf16.gmra.mrb[0].mxu0 %v757
    %v1503 = vpop.f32.mrb[0].mxu0
    %v1504 = vadd.f32 %v1391, %v1503
    %v1505 = vpop.f32.mrb[0].mxu0
    %v1506 = vadd.f32 %v1393, %v1505
    %v1507 = vpop.f32.mrb[0].mxu0
    %v1508 = vadd.f32 %v1395, %v1507
    %v1509 = vpop.f32.mrb[0].mxu0
    %v1510 = vadd.f32 %v1397, %v1509
    %1511 = vmatprep.mubr.bf16.mxu0 0
    %1512 = vmatmul.mubr.bf16.gmra.mrb[0].mxu0 %v762
    %v1513 = vpop.f32.mrb[0].mxu0
    %v1514 = vadd.f32 %v1401, %v1513
    %v1515 = vpop.f32.mrb[0].mxu0
    %v1516 = vadd.f32 %v1403, %v1515
    %v1517 = vpop.f32.mrb[0].mxu0
    %v1518 = vadd.f32 %v1405, %v1517
    %v1519 = vpop.f32.mrb[0].mxu0
    %v1520 = vadd.f32 %v1407, %v1519
    %1521 = vmatprep.mubr.bf16.mxu0 0
    %1522 = vmatmul.mubr.bf16.gmra.mrb[0].mxu0 %v767
    %v1523 = vpop.f32.mrb[0].mxu0
    %v1524 = vadd.f32 %v1411, %v1523
    %v1525 = vpop.f32.mrb[0].mxu0
    %v1526 = vadd.f32 %v1413, %v1525
    %v1527 = vpop.f32.mrb[0].mxu0
    %v1528 = vadd.f32 %v1415, %v1527
    %v1529 = vpop.f32.mrb[0].mxu0
    %v1530 = vadd.f32 %v1417, %v1529
    %1531 = vmatprep.mubr.bf16.mxu0 0
    %1532 = vmatmul.mubr.bf16.gmra.mrb[0].mxu0 %v772
    %v1533 = vpop.f32.mrb[0].mxu0
    %v1534 = vadd.f32 %v1421, %v1533
    %v1535 = vpop.f32.mrb[0].mxu0
    %v1536 = vadd.f32 %v1423, %v1535
    %v1537 = vpop.f32.mrb[0].mxu0
    %v1538 = vadd.f32 %v1425, %v1537
    %v1539 = vpop.f32.mrb[0].mxu0
    %v1540 = vadd.f32 %v1427, %v1539
    %1541 = vmatprep.mubr.bf16.mxu0 0
    %1542 = vmatmul.mubr.bf16.gmra.mrb[0].mxu0 %v777
    %v1543 = vpop.f32.mrb[0].mxu0
    %v1544 = vadd.f32 %v1431, %v1543
    %v1545 = vpop.f32.mrb[0].mxu0
    %v1546 = vadd.f32 %v1433, %v1545
    %v1547 = vpop.f32.mrb[0].mxu0
    %v1548 = vadd.f32 %v1435, %v1547
    %v1549 = vpop.f32.mrb[0].mxu0
    %v1550 = vadd.f32 %v1437, %v1549
    %1551 = vmatprep.mubr.bf16.mxu0 0
    %1552 = vmatmul.mubr.bf16.gmra.mrb[0].mxu0 %v782
    %v1553 = vpop.f32.mrb[0].mxu0
    %v1554 = vadd.f32 %v1441, %v1553
    %v1555 = vpop.f32.mrb[0].mxu0
    %v1556 = vadd.f32 %v1443, %v1555
    %v1557 = vpop.f32.mrb[0].mxu0
    %v1558 = vadd.f32 %v1445, %v1557
    %v1559 = vpop.f32.mrb[0].mxu0
    %v1560 = vadd.f32 %v1447, %v1559
    %1561 = vdwg.mxu0
    %v1562 = vld [vmem:[%s5] sm:$0x3]
    %v1564 = vlaneseq
    %v1565 = vshrl.u32 %v1564, 7
    %v1566 = vsub.s32 0, %v1565
    %v1567 = vrot.slane %v1562, %v1566
    %v1568 = vlaneseq
    %v1569 = vshrl.u32 %v1568, 7
    %v1570 = vsub.s32 1, %v1569
    %v1571 = vrot.slane %v1562, %v1570
    %v1574 = vmul.f32 %v1484, %v1567
    %v1575 = vmul.f32 %v1486, %v1571
    %v1576 = vmul.f32 %v1488, %v1567
    %v1577 = vmul.f32 %v1490, %v1571
    %v1578 = vmul.f32 %v1494, %v1567
    %v1579 = vmul.f32 %v1496, %v1571
    %v1580 = vmul.f32 %v1498, %v1567
    %v1581 = vmul.f32 %v1500, %v1571
    %v1582 = vmul.f32 %v1504, %v1567
    %v1583 = vmul.f32 %v1506, %v1571
    %v1584 = vmul.f32 %v1508, %v1567
    %v1585 = vmul.f32 %v1510, %v1571
    %v1586 = vmul.f32 %v1514, %v1567
    %v1587 = vmul.f32 %v1516, %v1571
    %v1588 = vmul.f32 %v1518, %v1567
    %v1589 = vmul.f32 %v1520, %v1571
    %v1590 = vmul.f32 %v1524, %v1567
    %v1591 = vmul.f32 %v1526, %v1571
    %v1592 = vmul.f32 %v1528, %v1567
    %v1593 = vmul.f32 %v1530, %v1571
    %v1594 = vmul.f32 %v1534, %v1567
    %v1595 = vmul.f32 %v1536, %v1571
    %v1596 = vmul.f32 %v1538, %v1567
    %v1597 = vmul.f32 %v1540, %v1571
    %v1598 = vmul.f32 %v1544, %v1567
    %v1599 = vmul.f32 %v1546, %v1571
    %v1600 = vmul.f32 %v1548, %v1567
    %v1601 = vmul.f32 %v1550, %v1571
    %v1602 = vmul.f32 %v1554, %v1567
    %v1603 = vmul.f32 %v1556, %v1571
    %v1604 = vmul.f32 %v1558, %v1567
    %v1605 = vmul.f32 %v1560, %v1571
    %v1606 = vld [vmem:[%s6] sm:$0x3]
    %v1608 = vlaneseq
    %v1609 = vshrl.u32 %v1608, 7
    %v1610 = vsub.s32 0, %v1609
    %v1611 = vrot.slane %v1606, %v1610
    %v1612 = vlaneseq
    %v1613 = vshrl.u32 %v1612, 7
    %v1614 = vsub.s32 1, %v1613
    %v1615 = vrot.slane %v1606, %v1614
    %v1618 = vadd.f32 %v1574, %v1611
    %v1619 = vadd.f32 %v1575, %v1615
    %v1620 = vadd.f32 %v1576, %v1611
    %v1621 = vadd.f32 %v1577, %v1615
    %v1622 = vadd.f32 %v1578, %v1611
    %v1623 = vadd.f32 %v1579, %v1615
    %v1624 = vadd.f32 %v1580, %v1611
    %v1625 = vadd.f32 %v1581, %v1615
    %v1626 = vadd.f32 %v1582, %v1611
    %v1627 = vadd.f32 %v1583, %v1615
    %v1628 = vadd.f32 %v1584, %v1611
    %v1629 = vadd.f32 %v1585, %v1615
    %v1630 = vadd.f32 %v1586, %v1611
    %v1631 = vadd.f32 %v1587, %v1615
    %v1632 = vadd.f32 %v1588, %v1611
    %v1633 = vadd.f32 %v1589, %v1615
    %v1634 = vadd.f32 %v1590, %v1611
    %v1635 = vadd.f32 %v1591, %v1615
    %v1636 = vadd.f32 %v1592, %v1611
    %v1637 = vadd.f32 %v1593, %v1615
    %v1638 = vadd.f32 %v1594, %v1611
    %v1639 = vadd.f32 %v1595, %v1615
    %v1640 = vadd.f32 %v1596, %v1611
    %v1641 = vadd.f32 %v1597, %v1615
    %v1642 = vadd.f32 %v1598, %v1611
    %v1643 = vadd.f32 %v1599, %v1615
    %v1644 = vadd.f32 %v1600, %v1611
    %v1645 = vadd.f32 %v1601, %v1615
    %v1646 = vadd.f32 %v1602, %v1611
    %v1647 = vadd.f32 %v1603, %v1615
    %v1648 = vadd.f32 %v1604, %v1611
    %v1649 = vadd.f32 %v1605, %v1615
    %v1650 = vmax.f32 %v1618, 0.0
    %v1651 = vmax.f32 %v1619, 0.0
    %v1652 = vmax.f32 %v1620, 0.0
    %v1653 = vmax.f32 %v1621, 0.0
    %v1654 = vmax.f32 %v1622, 0.0
    %v1655 = vmax.f32 %v1623, 0.0
    %v1656 = vmax.f32 %v1624, 0.0
    %v1657 = vmax.f32 %v1625, 0.0
    %v1658 = vmax.f32 %v1626, 0.0
    %v1659 = vmax.f32 %v1627, 0.0
    %v1660 = vmax.f32 %v1628, 0.0
    %v1661 = vmax.f32 %v1629, 0.0
    %v1662 = vmax.f32 %v1630, 0.0
    %v1663 = vmax.f32 %v1631, 0.0
    %v1664 = vmax.f32 %v1632, 0.0
    %v1665 = vmax.f32 %v1633, 0.0
    %v1666 = vmax.f32 %v1634, 0.0
    %v1667 = vmax.f32 %v1635, 0.0
    %v1668 = vmax.f32 %v1636, 0.0
    %v1669 = vmax.f32 %v1637, 0.0
    %v1670 = vmax.f32 %v1638, 0.0
    %v1671 = vmax.f32 %v1639, 0.0
    %v1672 = vmax.f32 %v1640, 0.0
    %v1673 = vmax.f32 %v1641, 0.0
    %v1674 = vmax.f32 %v1642, 0.0
    %v1675 = vmax.f32 %v1643, 0.0
    %v1676 = vmax.f32 %v1644, 0.0
    %v1677 = vmax.f32 %v1645, 0.0
    %v1678 = vmax.f32 %v1646, 0.0
    %v1679 = vmax.f32 %v1647, 0.0
    %v1680 = vmax.f32 %v1648, 0.0
    %v1681 = vmax.f32 %v1649, 0.0
    %v1682 = vpack.c.bf16 %v1650, %v1650
    %v1683 = vpack.c.bf16 %v1651, %v1651
    %v1684 = vpack.c.bf16 %v1652, %v1652
    %v1685 = vpack.c.bf16 %v1653, %v1653
    %v1686 = vpack.c.bf16 %v1654, %v1654
    %v1687 = vpack.c.bf16 %v1655, %v1655
    %v1688 = vpack.c.bf16 %v1656, %v1656
    %v1689 = vpack.c.bf16 %v1657, %v1657
    %v1690 = vpack.c.bf16 %v1658, %v1658
    %v1691 = vpack.c.bf16 %v1659, %v1659
    %v1692 = vpack.c.bf16 %v1660, %v1660
    %v1693 = vpack.c.bf16 %v1661, %v1661
    %v1694 = vpack.c.bf16 %v1662, %v1662
    %v1695 = vpack.c.bf16 %v1663, %v1663
    %v1696 = vpack.c.bf16 %v1664, %v1664
    %v1697 = vpack.c.bf16 %v1665, %v1665
    %v1698 = vpack.c.bf16 %v1666, %v1666
    %v1699 = vpack.c.bf16 %v1667, %v1667
    %v1700 = vpack.c.bf16 %v1668, %v1668
    %v1701 = vpack.c.bf16 %v1669, %v1669
    %v1702 = vpack.c.bf16 %v1670, %v1670
    %v1703 = vpack.c.bf16 %v1671, %v1671
    %v1704 = vpack.c.bf16 %v1672, %v1672
    %v1705 = vpack.c.bf16 %v1673, %v1673
    %v1706 = vpack.c.bf16 %v1674, %v1674
    %v1707 = vpack.c.bf16 %v1675, %v1675
    %v1708 = vpack.c.bf16 %v1676, %v1676
    %v1709 = vpack.c.bf16 %v1677, %v1677
    %v1710 = vpack.c.bf16 %v1678, %v1678
    %v1711 = vpack.c.bf16 %v1679, %v1679
    %v1712 = vpack.c.bf16 %v1680, %v1680
    %v1713 = vpack.c.bf16 %v1681, %v1681
    %v1746 = vunpack.c.l.b16 %v1682
    %v1747 = vunpack.c.l.b16 %v1683
    %v1748 = vunpack.c.l.b16 %v1684
    %v1749 = vunpack.c.l.b16 %v1685
    %v1750 = vunpack.c.l.b16 %v1686
    %v1751 = vunpack.c.l.b16 %v1687
    %v1752 = vunpack.c.l.b16 %v1688
    %v1753 = vunpack.c.l.b16 %v1689
    %v1754 = vunpack.c.l.b16 %v1690
    %v1755 = vunpack.c.l.b16 %v1691
    %v1756 = vunpack.c.l.b16 %v1692
    %v1757 = vunpack.c.l.b16 %v1693
    %v1758 = vunpack.c.l.b16 %v1694
    %v1759 = vunpack.c.l.b16 %v1695
    %v1760 = vunpack.c.l.b16 %v1696
    %v1761 = vunpack.c.l.b16 %v1697
    %v1762 = vunpack.c.l.b16 %v1698
    %v1763 = vunpack.c.l.b16 %v1699
    %v1764 = vunpack.c.l.b16 %v1700
    %v1765 = vunpack.c.l.b16 %v1701
    %v1766 = vunpack.c.l.b16 %v1702
    %v1767 = vunpack.c.l.b16 %v1703
    %v1768 = vunpack.c.l.b16 %v1704
    %v1769 = vunpack.c.l.b16 %v1705
    %v1770 = vunpack.c.l.b16 %v1706
    %v1771 = vunpack.c.l.b16 %v1707
    %v1772 = vunpack.c.l.b16 %v1708
    %v1773 = vunpack.c.l.b16 %v1709
    %v1774 = vunpack.c.l.b16 %v1710
    %v1775 = vunpack.c.l.b16 %v1711
    %v1776 = vunpack.c.l.b16 %v1712
    %v1777 = vunpack.c.l.b16 %v1713
    %v1778 = vpack.c.b16 %v1747, %v1746
    %v1779 = vpack.c.b16 %v1749, %v1748
    %v1780 = vpack.c.b16 %v1751, %v1750
    %v1781 = vpack.c.b16 %v1753, %v1752
    %v1782 = vpack.c.b16 %v1755, %v1754
    %v1783 = vpack.c.b16 %v1757, %v1756
    %v1784 = vpack.c.b16 %v1759, %v1758
    %v1785 = vpack.c.b16 %v1761, %v1760
    %v1786 = vpack.c.b16 %v1763, %v1762
    %v1787 = vpack.c.b16 %v1765, %v1764
    %v1788 = vpack.c.b16 %v1767, %v1766
    %v1789 = vpack.c.b16 %v1769, %v1768
    %v1790 = vpack.c.b16 %v1771, %v1770
    %v1791 = vpack.c.b16 %v1773, %v1772
    %v1792 = vpack.c.b16 %v1775, %v1774
    %v1793 = vpack.c.b16 %v1777, %v1776
    %s1810 = scalar_lea.vmem [#allocation3], 8
    %1811 = vst [vmem:[%s1810] sm:$0xff] %v1778
    %1812 = vst [vmem:[%s1810 + $0x8] sm:$0xff] %v1779
    %1813 = vst [vmem:[%s1810 + $0x10] sm:$0xff] %v1780
    %1814 = vst [vmem:[%s1810 + $0x18] sm:$0xff] %v1781
    %1815 = vst [vmem:[%s1810 + $0x20] sm:$0xff] %v1782
    %1816 = vst [vmem:[%s1810 + $0x28] sm:$0xff] %v1783
    %1817 = vst [vmem:[%s1810 + $0x30] sm:$0xff] %v1784
    %1818 = vst [vmem:[%s1810 + $0x38] sm:$0xff] %v1785
    %1819 = vst [vmem:[%s1810 + $0x40] sm:$0xff] %v1786
    %1820 = vst [vmem:[%s1810 + $0x48] sm:$0xff] %v1787
    %1821 = vst [vmem:[%s1810 + $0x50] sm:$0xff] %v1788
    %1822 = vst [vmem:[%s1810 + $0x58] sm:$0xff] %v1789
    %1823 = vst [vmem:[%s1810 + $0x60] sm:$0xff] %v1790
    %1824 = vst [vmem:[%s1810 + $0x68] sm:$0xff] %v1791
    %1825 = vst [vmem:[%s1810 + $0x70] sm:$0xff] %v1792
    %1826 = vst [vmem:[%s1810 + $0x78] sm:$0xff] %v1793
    %v1827 = vld [vmem:[#allocation3] sm:$0xff]
    %v1828 = vld [vmem:[#allocation3 + $0x8] sm:$0xff]
    %v1829 = vld [vmem:[#allocation3 + $0x10] sm:$0xff]
    %v1830 = vld [vmem:[#allocation3 + $0x18] sm:$0xff]
    %v1831 = vld [vmem:[#allocation3 + $0x20] sm:$0xff]
    %v1832 = vld [vmem:[#allocation3 + $0x28] sm:$0xff]
    %v1833 = vld [vmem:[#allocation3 + $0x30] sm:$0xff]
    %v1834 = vld [vmem:[#allocation3 + $0x38] sm:$0xff]
    %v1835 = vld [vmem:[#allocation3 + $0x40] sm:$0xff]
    %v1836 = vld [vmem:[#allocation3 + $0x48] sm:$0xff]
    %v1837 = vld [vmem:[#allocation3 + $0x50] sm:$0xff]
    %v1838 = vld [vmem:[#allocation3 + $0x58] sm:$0xff]
    %v1839 = vld [vmem:[#allocation3 + $0x60] sm:$0xff]
    %v1840 = vld [vmem:[#allocation3 + $0x68] sm:$0xff]
    %v1841 = vld [vmem:[#allocation3 + $0x70] sm:$0xff]
    %v1842 = vld [vmem:[#allocation3 + $0x78] sm:$0xff]
    %v1843 = vld [vmem:[%s1810] sm:$0xff]
    %v1844 = vld [vmem:[%s1810 + $0x8] sm:$0xff]
    %v1845 = vld [vmem:[%s1810 + $0x10] sm:$0xff]
    %v1846 = vld [vmem:[%s1810 + $0x18] sm:$0xff]
    %v1847 = vld [vmem:[%s1810 + $0x20] sm:$0xff]
    %v1848 = vld [vmem:[%s1810 + $0x28] sm:$0xff]
    %v1849 = vld [vmem:[%s1810 + $0x30] sm:$0xff]
    %v1850 = vld [vmem:[%s1810 + $0x38] sm:$0xff]
    %v1851 = vld [vmem:[%s1810 + $0x40] sm:$0xff]
    %v1852 = vld [vmem:[%s1810 + $0x48] sm:$0xff]
    %v1853 = vld [vmem:[%s1810 + $0x50] sm:$0xff]
    %v1854 = vld [vmem:[%s1810 + $0x58] sm:$0xff]
    %v1855 = vld [vmem:[%s1810 + $0x60] sm:$0xff]
    %v1856 = vld [vmem:[%s1810 + $0x68] sm:$0xff]
    %v1857 = vld [vmem:[%s1810 + $0x70] sm:$0xff]
    %v1858 = vld [vmem:[%s1810 + $0x78] sm:$0xff]
    %s1859 = scalar_lea.vmem [#allocation3], 16
    %v1860 = vld [vmem:[%s1859] sm:$0xff]
    %v1861 = vld [vmem:[%s1859 + $0x8] sm:$0xff]
    %v1862 = vld [vmem:[%s1859 + $0x10] sm:$0xff]
    %v1863 = vld [vmem:[%s1859 + $0x18] sm:$0xff]
    %v1864 = vld [vmem:[%s1859 + $0x20] sm:$0xff]
    %v1865 = vld [vmem:[%s1859 + $0x28] sm:$0xff]
    %v1866 = vld [vmem:[%s1859 + $0x30] sm:$0xff]
    %v1867 = vld [vmem:[%s1859 + $0x38] sm:$0xff]
    %v1868 = vld [vmem:[%s1859 + $0x40] sm:$0xff]
    %v1869 = vld [vmem:[%s1859 + $0x48] sm:$0xff]
    %v1870 = vld [vmem:[%s1859 + $0x50] sm:$0xff]
    %v1871 = vld [vmem:[%s1859 + $0x58] sm:$0xff]
    %v1872 = vld [vmem:[%s1859 + $0x60] sm:$0xff]
    %v1873 = vld [vmem:[%s1859 + $0x68] sm:$0xff]
    %v1874 = vld [vmem:[%s1859 + $0x70] sm:$0xff]
    %v1875 = vld [vmem:[%s1859 + $0x78] sm:$0xff]
    %v1892 = vunpack.c.l.b16 %v1827
    %v1893 = vunpack.c.h.b16 %v1827
    %v1894 = vunpack.c.l.b16 %v1828
    %v1895 = vunpack.c.h.b16 %v1828
    %v1896 = vunpack.c.l.b16 %v1829
    %v1897 = vunpack.c.h.b16 %v1829
    %v1898 = vunpack.c.l.b16 %v1830
    %v1899 = vunpack.c.h.b16 %v1830
    %v1900 = vunpack.c.l.b16 %v1831
    %v1901 = vunpack.c.h.b16 %v1831
    %v1902 = vunpack.c.l.b16 %v1832
    %v1903 = vunpack.c.h.b16 %v1832
    %v1904 = vunpack.c.l.b16 %v1833
    %v1905 = vunpack.c.h.b16 %v1833
    %v1906 = vunpack.c.l.b16 %v1834
    %v1907 = vunpack.c.h.b16 %v1834
    %v1908 = vunpack.c.l.b16 %v1835
    %v1909 = vunpack.c.h.b16 %v1835
    %v1910 = vunpack.c.l.b16 %v1836
    %v1911 = vunpack.c.h.b16 %v1836
    %v1912 = vunpack.c.l.b16 %v1837
    %v1913 = vunpack.c.h.b16 %v1837
    %v1914 = vunpack.c.l.b16 %v1838
    %v1915 = vunpack.c.h.b16 %v1838
    %v1916 = vunpack.c.l.b16 %v1839
    %v1917 = vunpack.c.h.b16 %v1839
    %v1918 = vunpack.c.l.b16 %v1840
    %v1919 = vunpack.c.h.b16 %v1840
    %v1920 = vunpack.c.l.b16 %v1841
    %v1921 = vunpack.c.h.b16 %v1841
    %v1922 = vunpack.c.l.b16 %v1842
    %v1923 = vunpack.c.h.b16 %v1842
    %v1940 = vunpack.c.l.b16 %v1843
    %v1941 = vunpack.c.h.b16 %v1843
    %v1942 = vunpack.c.l.b16 %v1844
    %v1943 = vunpack.c.h.b16 %v1844
    %v1944 = vunpack.c.l.b16 %v1845
    %v1945 = vunpack.c.h.b16 %v1845
    %v1946 = vunpack.c.l.b16 %v1846
    %v1947 = vunpack.c.h.b16 %v1846
    %v1948 = vunpack.c.l.b16 %v1847
    %v1949 = vunpack.c.h.b16 %v1847
    %v1950 = vunpack.c.l.b16 %v1848
    %v1951 = vunpack.c.h.b16 %v1848
    %v1952 = vunpack.c.l.b16 %v1849
    %v1953 = vunpack.c.h.b16 %v1849
    %v1954 = vunpack.c.l.b16 %v1850
    %v1955 = vunpack.c.h.b16 %v1850
    %v1956 = vunpack.c.l.b16 %v1851
    %v1957 = vunpack.c.h.b16 %v1851
    %v1958 = vunpack.c.l.b16 %v1852
    %v1959 = vunpack.c.h.b16 %v1852
    %v1960 = vunpack.c.l.b16 %v1853
    %v1961 = vunpack.c.h.b16 %v1853
    %v1962 = vunpack.c.l.b16 %v1854
    %v1963 = vunpack.c.h.b16 %v1854
    %v1964 = vunpack.c.l.b16 %v1855
    %v1965 = vunpack.c.h.b16 %v1855
    %v1966 = vunpack.c.l.b16 %v1856
    %v1967 = vunpack.c.h.b16 %v1856
    %v1968 = vunpack.c.l.b16 %v1857
    %v1969 = vunpack.c.h.b16 %v1857
    %v1970 = vunpack.c.l.b16 %v1858
    %v1971 = vunpack.c.h.b16 %v1858
    %v1988 = vunpack.c.l.b16 %v1860
    %v1989 = vunpack.c.h.b16 %v1860
    %v1990 = vunpack.c.l.b16 %v1861
    %v1991 = vunpack.c.h.b16 %v1861
    %v1992 = vunpack.c.l.b16 %v1862
    %v1993 = vunpack.c.h.b16 %v1862
    %v1994 = vunpack.c.l.b16 %v1863
    %v1995 = vunpack.c.h.b16 %v1863
    %v1996 = vunpack.c.l.b16 %v1864
    %v1997 = vunpack.c.h.b16 %v1864
    %v1998 = vunpack.c.l.b16 %v1865
    %v1999 = vunpack.c.h.b16 %v1865
    %v2000 = vunpack.c.l.b16 %v1866
    %v2001 = vunpack.c.h.b16 %v1866
    %v2002 = vunpack.c.l.b16 %v1867
    %v2003 = vunpack.c.h.b16 %v1867
    %v2004 = vunpack.c.l.b16 %v1868
    %v2005 = vunpack.c.h.b16 %v1868
    %v2006 = vunpack.c.l.b16 %v1869
    %v2007 = vunpack.c.h.b16 %v1869
    %v2008 = vunpack.c.l.b16 %v1870
    %v2009 = vunpack.c.h.b16 %v1870
    %v2010 = vunpack.c.l.b16 %v1871
    %v2011 = vunpack.c.h.b16 %v1871
    %v2012 = vunpack.c.l.b16 %v1872
    %v2013 = vunpack.c.h.b16 %v1872
    %v2014 = vunpack.c.l.b16 %v1873
    %v2015 = vunpack.c.h.b16 %v1873
    %v2016 = vunpack.c.l.b16 %v1874
    %v2017 = vunpack.c.h.b16 %v1874
    %v2018 = vunpack.c.l.b16 %v1875
    %v2019 = vunpack.c.h.b16 %v1875
    %v2020 = vld [vmem:[#allocation10] sm:$0xf]
    %v2021 = vld [vmem:[#allocation10 + $0x4] sm:$0xf]
    %v2022 = vld [vmem:[#allocation10 + $0x8] sm:$0xf]
    %v2023 = vld [vmem:[#allocation10 + $0xc] sm:$0xf]
    %v2024 = vld [vmem:[#allocation10 + $0x10] sm:$0xf]
    %v2025 = vld [vmem:[#allocation10 + $0x14] sm:$0xf]
    %v2026 = vld [vmem:[#allocation10 + $0x18] sm:$0xf]
    %v2027 = vld [vmem:[#allocation10 + $0x1c] sm:$0xf]
    %v2028 = vld [vmem:[#allocation10 + $0x20] sm:$0xf]
    %v2029 = vld [vmem:[#allocation10 + $0x24] sm:$0xf]
    %v2030 = vld [vmem:[#allocation10 + $0x28] sm:$0xf]
    %v2031 = vld [vmem:[#allocation10 + $0x2c] sm:$0xf]
    %v2032 = vld [vmem:[#allocation10 + $0x30] sm:$0xf]
    %v2033 = vld [vmem:[#allocation10 + $0x34] sm:$0xf]
    %v2034 = vld [vmem:[#allocation10 + $0x38] sm:$0xf]
    %v2035 = vld [vmem:[#allocation10 + $0x3c] sm:$0xf]
    %v2036 = vld [vmem:[#allocation10 + $0x40] sm:$0xf]
    %v2037 = vld [vmem:[#allocation10 + $0x44] sm:$0xf]
    %v2038 = vld [vmem:[#allocation10 + $0x48] sm:$0xf]
    %v2039 = vld [vmem:[#allocation10 + $0x4c] sm:$0xf]
    %v2040 = vld [vmem:[#allocation10 + $0x50] sm:$0xf]
    %v2041 = vld [vmem:[#allocation10 + $0x54] sm:$0xf]
    %v2042 = vld [vmem:[#allocation10 + $0x58] sm:$0xf]
    %v2043 = vld [vmem:[#allocation10 + $0x5c] sm:$0xf]
    %v2044 = vld [vmem:[#allocation10 + $0x60] sm:$0xf]
    %v2045 = vld [vmem:[#allocation10 + $0x64] sm:$0xf]
    %v2046 = vld [vmem:[#allocation10 + $0x68] sm:$0xf]
    %v2047 = vld [vmem:[#allocation10 + $0x6c] sm:$0xf]
    %v2048 = vld [vmem:[#allocation10 + $0x70] sm:$0xf]
    %v2049 = vld [vmem:[#allocation10 + $0x74] sm:$0xf]
    %v2050 = vld [vmem:[#allocation10 + $0x78] sm:$0xf]
    %v2051 = vld [vmem:[#allocation10 + $0x7c] sm:$0xf]
    %v2052 = vld [vmem:[#allocation10 + $0x80] sm:$0xf]
    %v2053 = vld [vmem:[#allocation10 + $0x84] sm:$0xf]
    %v2054 = vld [vmem:[#allocation10 + $0x88] sm:$0xf]
    %v2055 = vld [vmem:[#allocation10 + $0x8c] sm:$0xf]
    %v2056 = vld [vmem:[#allocation10 + $0x90] sm:$0xf]
    %v2057 = vld [vmem:[#allocation10 + $0x94] sm:$0xf]
    %v2058 = vld [vmem:[#allocation10 + $0x98] sm:$0xf]
    %v2059 = vld [vmem:[#allocation10 + $0x9c] sm:$0xf]
    %v2060 = vld [vmem:[#allocation10 + $0xa0] sm:$0xf]
    %v2061 = vld [vmem:[#allocation10 + $0xa4] sm:$0xf]
    %v2062 = vld [vmem:[#allocation10 + $0xa8] sm:$0xf]
    %v2063 = vld [vmem:[#allocation10 + $0xac] sm:$0xf]
    %v2064 = vld [vmem:[#allocation10 + $0xb0] sm:$0xf]
    %v2065 = vld [vmem:[#allocation10 + $0xb4] sm:$0xf]
    %v2066 = vld [vmem:[#allocation10 + $0xb8] sm:$0xf]
    %v2067 = vld [vmem:[#allocation10 + $0xbc] sm:$0xf]
    %v2068 = vld [vmem:[#allocation10 + $0xc0] sm:$0xf]
    %v2069 = vld [vmem:[#allocation10 + $0xc4] sm:$0xf]
    %v2070 = vld [vmem:[#allocation10 + $0xc8] sm:$0xf]
    %v2071 = vld [vmem:[#allocation10 + $0xcc] sm:$0xf]
    %v2072 = vld [vmem:[#allocation10 + $0xd0] sm:$0xf]
    %v2073 = vld [vmem:[#allocation10 + $0xd4] sm:$0xf]
    %v2074 = vld [vmem:[#allocation10 + $0xd8] sm:$0xf]
    %v2075 = vld [vmem:[#allocation10 + $0xdc] sm:$0xf]
    %v2076 = vld [vmem:[#allocation10 + $0xe0] sm:$0xf]
    %v2077 = vld [vmem:[#allocation10 + $0xe4] sm:$0xf]
    %v2078 = vld [vmem:[#allocation10 + $0xe8] sm:$0xf]
    %v2079 = vld [vmem:[#allocation10 + $0xec] sm:$0xf]
    %v2080 = vld [vmem:[#allocation10 + $0xf0] sm:$0xf]
    %v2081 = vld [vmem:[#allocation10 + $0xf4] sm:$0xf]
    %v2082 = vld [vmem:[#allocation10 + $0xf8] sm:$0xf]
    %v2083 = vld [vmem:[#allocation10 + $0xfc] sm:$0xf]
    %v2084 = vld [vmem:[#allocation10 + $0x100] sm:$0xf]
    %v2085 = vld [vmem:[#allocation10 + $0x104] sm:$0xf]
    %v2086 = vld [vmem:[#allocation10 + $0x108] sm:$0xf]
    %v2087 = vld [vmem:[#allocation10 + $0x10c] sm:$0xf]
    %v2088 = vld [vmem:[#allocation10 + $0x110] sm:$0xf]
    %v2089 = vld [vmem:[#allocation10 + $0x114] sm:$0xf]
    %v2090 = vld [vmem:[#allocation10 + $0x118] sm:$0xf]
    %v2091 = vld [vmem:[#allocation10 + $0x11c] sm:$0xf]
    %v2092 = vld [vmem:[#allocation10 + $0x120] sm:$0xf]
    %v2093 = vld [vmem:[#allocation10 + $0x124] sm:$0xf]
    %v2094 = vld [vmem:[#allocation10 + $0x128] sm:$0xf]
    %v2095 = vld [vmem:[#allocation10 + $0x12c] sm:$0xf]
    %v2096 = vld [vmem:[#allocation10 + $0x130] sm:$0xf]
    %v2097 = vld [vmem:[#allocation10 + $0x134] sm:$0xf]
    %v2098 = vld [vmem:[#allocation10 + $0x138] sm:$0xf]
    %v2099 = vld [vmem:[#allocation10 + $0x13c] sm:$0xf]
    %v2100 = vld [vmem:[#allocation10 + $0x140] sm:$0xf]
    %v2101 = vld [vmem:[#allocation10 + $0x144] sm:$0xf]
    %v2102 = vld [vmem:[#allocation10 + $0x148] sm:$0xf]
    %v2103 = vld [vmem:[#allocation10 + $0x14c] sm:$0xf]
    %v2104 = vld [vmem:[#allocation10 + $0x150] sm:$0xf]
    %v2105 = vld [vmem:[#allocation10 + $0x154] sm:$0xf]
    %v2106 = vld [vmem:[#allocation10 + $0x158] sm:$0xf]
    %v2107 = vld [vmem:[#allocation10 + $0x15c] sm:$0xf]
    %v2108 = vld [vmem:[#allocation10 + $0x160] sm:$0xf]
    %v2109 = vld [vmem:[#allocation10 + $0x164] sm:$0xf]
    %v2110 = vld [vmem:[#allocation10 + $0x168] sm:$0xf]
    %v2111 = vld [vmem:[#allocation10 + $0x16c] sm:$0xf]
    %v2112 = vld [vmem:[#allocation10 + $0x170] sm:$0xf]
    %v2113 = vld [vmem:[#allocation10 + $0x174] sm:$0xf]
    %v2114 = vld [vmem:[#allocation10 + $0x178] sm:$0xf]
    %v2115 = vld [vmem:[#allocation10 + $0x17c] sm:$0xf]
    %v2116 = vpack.c.b16 %v1894, %v1892
    %v2117 = vpack.c.b16 %v1895, %v1893
    %v2118 = vpack.c.b16 %v1942, %v1940
    %v2119 = vpack.c.b16 %v1943, %v1941
    %v2120 = vpack.c.b16 %v1990, %v1988
    %v2121 = vpack.c.b16 %v1991, %v1989
    %v2122 = vpack.c.b16 %v1898, %v1896
    %v2123 = vpack.c.b16 %v1899, %v1897
    %v2124 = vpack.c.b16 %v1946, %v1944
    %v2125 = vpack.c.b16 %v1947, %v1945
    %v2126 = vpack.c.b16 %v1994, %v1992
    %v2127 = vpack.c.b16 %v1995, %v1993
    %v2128 = vpack.c.b16 %v1902, %v1900
    %v2129 = vpack.c.b16 %v1903, %v1901
    %v2130 = vpack.c.b16 %v1950, %v1948
    %v2131 = vpack.c.b16 %v1951, %v1949
    %v2132 = vpack.c.b16 %v1998, %v1996
    %v2133 = vpack.c.b16 %v1999, %v1997
    %v2134 = vpack.c.b16 %v1906, %v1904
    %v2135 = vpack.c.b16 %v1907, %v1905
    %v2136 = vpack.c.b16 %v1954, %v1952
    %v2137 = vpack.c.b16 %v1955, %v1953
    %v2138 = vpack.c.b16 %v2002, %v2000
    %v2139 = vpack.c.b16 %v2003, %v2001
    %v2140 = vpack.c.b16 %v1910, %v1908
    %v2141 = vpack.c.b16 %v1911, %v1909
    %v2142 = vpack.c.b16 %v1958, %v1956
    %v2143 = vpack.c.b16 %v1959, %v1957
    %v2144 = vpack.c.b16 %v2006, %v2004
    %v2145 = vpack.c.b16 %v2007, %v2005
    %v2146 = vpack.c.b16 %v1914, %v1912
    %v2147 = vpack.c.b16 %v1915, %v1913
    %v2148 = vpack.c.b16 %v1962, %v1960
    %v2149 = vpack.c.b16 %v1963, %v1961
    %v2150 = vpack.c.b16 %v2010, %v2008
    %v2151 = vpack.c.b16 %v2011, %v2009
    %v2152 = vpack.c.b16 %v1918, %v1916
    %v2153 = vpack.c.b16 %v1919, %v1917
    %v2154 = vpack.c.b16 %v1966, %v1964
    %v2155 = vpack.c.b16 %v1967, %v1965
    %v2156 = vpack.c.b16 %v2014, %v2012
    %v2157 = vpack.c.b16 %v2015, %v2013
    %v2158 = vpack.c.b16 %v1922, %v1920
    %v2159 = vpack.c.b16 %v1923, %v1921
    %v2160 = vpack.c.b16 %v1970, %v1968
    %v2161 = vpack.c.b16 %v1971, %v1969
    %v2162 = vpack.c.b16 %v2018, %v2016
    %v2163 = vpack.c.b16 %v2019, %v2017
    %v2308 = vunpack.c.l.b16 %v2020
    %v2309 = vunpack.c.l.b16 %v2021
    %v2310 = vunpack.c.l.b16 %v2022
    %v2311 = vunpack.c.l.b16 %v2023
    %v2312 = vunpack.c.l.b16 %v2024
    %v2313 = vunpack.c.l.b16 %v2025
    %v2314 = vunpack.c.l.b16 %v2026
    %v2315 = vunpack.c.l.b16 %v2027
    %v2316 = vunpack.c.l.b16 %v2028
    %v2317 = vunpack.c.l.b16 %v2029
    %v2318 = vunpack.c.l.b16 %v2030
    %v2319 = vunpack.c.l.b16 %v2031
    %v2320 = vunpack.c.l.b16 %v2032
    %v2321 = vunpack.c.l.b16 %v2033
    %v2322 = vunpack.c.l.b16 %v2034
    %v2323 = vunpack.c.l.b16 %v2035
    %v2324 = vunpack.c.l.b16 %v2036
    %v2325 = vunpack.c.l.b16 %v2037
    %v2326 = vunpack.c.l.b16 %v2038
    %v2327 = vunpack.c.l.b16 %v2039
    %v2328 = vunpack.c.l.b16 %v2040
    %v2329 = vunpack.c.l.b16 %v2041
    %v2330 = vunpack.c.l.b16 %v2042
    %v2331 = vunpack.c.l.b16 %v2043
    %v2332 = vunpack.c.l.b16 %v2044
    %v2333 = vunpack.c.l.b16 %v2045
    %v2334 = vunpack.c.l.b16 %v2046
    %v2335 = vunpack.c.l.b16 %v2047
    %v2336 = vunpack.c.l.b16 %v2048
    %v2337 = vunpack.c.l.b16 %v2049
    %v2338 = vunpack.c.l.b16 %v2050
    %v2339 = vunpack.c.l.b16 %v2051
    %v2340 = vunpack.c.l.b16 %v2052
    %v2341 = vunpack.c.l.b16 %v2053
    %v2342 = vunpack.c.l.b16 %v2054
    %v2343 = vunpack.c.l.b16 %v2055
    %v2344 = vunpack.c.l.b16 %v2056
    %v2345 = vunpack.c.l.b16 %v2057
    %v2346 = vunpack.c.l.b16 %v2058
    %v2347 = vunpack.c.l.b16 %v2059
    %v2348 = vunpack.c.l.b16 %v2060
    %v2349 = vunpack.c.l.b16 %v2061
    %v2350 = vunpack.c.l.b16 %v2062
    %v2351 = vunpack.c.l.b16 %v2063
    %v2352 = vunpack.c.l.b16 %v2064
    %v2353 = vunpack.c.l.b16 %v2065
    %v2354 = vunpack.c.l.b16 %v2066
    %v2355 = vunpack.c.l.b16 %v2067
    %v2356 = vunpack.c.l.b16 %v2068
    %v2357 = vunpack.c.l.b16 %v2069
    %v2358 = vunpack.c.l.b16 %v2070
    %v2359 = vunpack.c.l.b16 %v2071
    %v2360 = vunpack.c.l.b16 %v2072
    %v2361 = vunpack.c.l.b16 %v2073
    %v2362 = vunpack.c.l.b16 %v2074
    %v2363 = vunpack.c.l.b16 %v2075
    %v2364 = vunpack.c.l.b16 %v2076
    %v2365 = vunpack.c.l.b16 %v2077
    %v2366 = vunpack.c.l.b16 %v2078
    %v2367 = vunpack.c.l.b16 %v2079
    %v2368 = vunpack.c.l.b16 %v2080
    %v2369 = vunpack.c.l.b16 %v2081
    %v2370 = vunpack.c.l.b16 %v2082
    %v2371 = vunpack.c.l.b16 %v2083
    %v2372 = vunpack.c.l.b16 %v2084
    %v2373 = vunpack.c.l.b16 %v2085
    %v2374 = vunpack.c.l.b16 %v2086
    %v2375 = vunpack.c.l.b16 %v2087
    %v2376 = vunpack.c.l.b16 %v2088
    %v2377 = vunpack.c.l.b16 %v2089
    %v2378 = vunpack.c.l.b16 %v2090
    %v2379 = vunpack.c.l.b16 %v2091
    %v2380 = vunpack.c.l.b16 %v2092
    %v2381 = vunpack.c.l.b16 %v2093
    %v2382 = vunpack.c.l.b16 %v2094
    %v2383 = vunpack.c.l.b16 %v2095
    %v2384 = vunpack.c.l.b16 %v2096
    %v2385 = vunpack.c.l.b16 %v2097
    %v2386 = vunpack.c.l.b16 %v2098
    %v2387 = vunpack.c.l.b16 %v2099
    %v2388 = vunpack.c.l.b16 %v2100
    %v2389 = vunpack.c.l.b16 %v2101
    %v2390 = vunpack.c.l.b16 %v2102
    %v2391 = vunpack.c.l.b16 %v2103
    %v2392 = vunpack.c.l.b16 %v2104
    %v2393 = vunpack.c.l.b16 %v2105
    %v2394 = vunpack.c.l.b16 %v2106
    %v2395 = vunpack.c.l.b16 %v2107
    %v2396 = vunpack.c.l.b16 %v2108
    %v2397 = vunpack.c.l.b16 %v2109
    %v2398 = vunpack.c.l.b16 %v2110
    %v2399 = vunpack.c.l.b16 %v2111
    %v2400 = vunpack.c.l.b16 %v2112
    %v2401 = vunpack.c.l.b16 %v2113
    %v2402 = vunpack.c.l.b16 %v2114
    %v2403 = vunpack.c.l.b16 %v2115
    %v2404 = vpack.c.b16 %v2309, %v2308
    %v2405 = vpack.c.b16 %v2311, %v2310
    %v2406 = vpack.c.b16 %v2313, %v2312
    %v2407 = vpack.c.b16 %v2315, %v2314
    %v2408 = vpack.c.b16 %v2317, %v2316
    %v2409 = vpack.c.b16 %v2319, %v2318
    %v2410 = vpack.c.b16 %v2321, %v2320
    %v2411 = vpack.c.b16 %v2323, %v2322
    %v2412 = vpack.c.b16 %v2325, %v2324
    %v2413 = vpack.c.b16 %v2327, %v2326
    %v2414 = vpack.c.b16 %v2329, %v2328
    %v2415 = vpack.c.b16 %v2331, %v2330
    %v2416 = vpack.c.b16 %v2333, %v2332
    %v2417 = vpack.c.b16 %v2335, %v2334
    %v2418 = vpack.c.b16 %v2337, %v2336
    %v2419 = vpack.c.b16 %v2339, %v2338
    %v2420 = vpack.c.b16 %v2341, %v2340
    %v2421 = vpack.c.b16 %v2343, %v2342
    %v2422 = vpack.c.b16 %v2345, %v2344
    %v2423 = vpack.c.b16 %v2347, %v2346
    %v2424 = vpack.c.b16 %v2349, %v2348
    %v2425 = vpack.c.b16 %v2351, %v2350
    %v2426 = vpack.c.b16 %v2353, %v2352
    %v2427 = vpack.c.b16 %v2355, %v2354
    %v2428 = vpack.c.b16 %v2357, %v2356
    %v2429 = vpack.c.b16 %v2359, %v2358
    %v2430 = vpack.c.b16 %v2361, %v2360
    %v2431 = vpack.c.b16 %v2363, %v2362
    %v2432 = vpack.c.b16 %v2365, %v2364
    %v2433 = vpack.c.b16 %v2367, %v2366
    %v2434 = vpack.c.b16 %v2369, %v2368
    %v2435 = vpack.c.b16 %v2371, %v2370
    %v2436 = vpack.c.b16 %v2373, %v2372
    %v2437 = vpack.c.b16 %v2375, %v2374
    %v2438 = vpack.c.b16 %v2377, %v2376
    %v2439 = vpack.c.b16 %v2379, %v2378
    %v2440 = vpack.c.b16 %v2381, %v2380
    %v2441 = vpack.c.b16 %v2383, %v2382
    %v2442 = vpack.c.b16 %v2385, %v2384
    %v2443 = vpack.c.b16 %v2387, %v2386
    %v2444 = vpack.c.b16 %v2389, %v2388
    %v2445 = vpack.c.b16 %v2391, %v2390
    %v2446 = vpack.c.b16 %v2393, %v2392
    %v2447 = vpack.c.b16 %v2395, %v2394
    %v2448 = vpack.c.b16 %v2397, %v2396
    %v2449 = vpack.c.b16 %v2399, %v2398
    %v2450 = vpack.c.b16 %v2401, %v2400
    %v2451 = vpack.c.b16 %v2403, %v2402
    %2500 = vmatprep.subr.bf16.mxu0 0
    %2501 = vmatpush1.bf16.msra.mxu0 %v2404
    %2502 = vmatprep.subr.bf16.mxu0 0
    %2503 = vmatpush1.bf16.msra.mxu0 %v2405
    %2504 = vmatprep.subr.bf16.mxu0 0
    %2505 = vmatpush1.bf16.msra.mxu0 %v2406
    %2506 = vmatprep.subr.bf16.mxu0 0
    %2507 = vmatpush1.bf16.msra.mxu0 %v2407
    %2508 = vmatprep.subr.bf16.mxu0 0
    %2509 = vmatpush1.bf16.msra.mxu0 %v2408
    %2510 = vmatprep.subr.bf16.mxu0 0
    %2511 = vmatpush1.bf16.msra.mxu0 %v2409
    %2512 = vmatprep.subr.bf16.mxu0 0
    %2513 = vmatpush1.bf16.msra.mxu0 %v2410
    %2514 = vmatprep.subr.bf16.mxu0 0
    %2515 = vmatpush1.bf16.msra.mxu0 %v2411
    %2516 = vmatprep.subr.bf16.mxu0 0
    %2517 = vmatpush1.bf16.msra.mxu0 %v2412
    %2518 = vmatprep.subr.bf16.mxu0 0
    %2519 = vmatpush1.bf16.msra.mxu0 %v2413
    %2520 = vmatprep.subr.bf16.mxu0 0
    %2521 = vmatpush1.bf16.msra.mxu0 %v2414
    %2522 = vmatprep.subr.bf16.mxu0 0
    %2523 = vmatpush1.bf16.msra.mxu0 %v2415
    %2524 = vmatprep.subr.bf16.mxu0 0
    %2525 = vmatpush1.bf16.msra.mxu0 %v2416
    %2526 = vmatprep.subr.bf16.mxu0 0
    %2527 = vmatpush1.bf16.msra.mxu0 %v2417
    %2528 = vmatprep.subr.bf16.mxu0 0
    %2529 = vmatpush1.bf16.msra.mxu0 %v2418
    %2530 = vmatprep.subr.bf16.mxu0 0
    %2531 = vmatpush1.bf16.msra.mxu0 %v2419
    %2532 = vmatprep.mubr.bf16.mxu0 %v2117
    %2533 = vmatmul.mubr.bf16.gmra.mrb[0].mxu0 %v2116
    %v2534 = vpop.f32.mrb[0].mxu0
    %v2535 = vadd.f32 0.0, %v2534
    %v2536 = vpop.f32.mrb[0].mxu0
    %v2537 = vpop.f32.mrb[0].mxu0
    %v2538 = vadd.f32 0.0, %v2537
    %v2539 = vpop.f32.mrb[0].mxu0
    %2540 = vmatprep.mubr.bf16.mxu0 %v2123
    %2541 = vmatmul.mubr.bf16.gmra.mrb[0].mxu0 %v2122
    %v2542 = vpop.f32.mrb[0].mxu0
    %v2543 = vadd.f32 0.0, %v2542
    %v2544 = vpop.f32.mrb[0].mxu0
    %v2545 = vpop.f32.mrb[0].mxu0
    %v2546 = vadd.f32 0.0, %v2545
    %v2547 = vpop.f32.mrb[0].mxu0
    %2548 = vmatprep.mubr.bf16.mxu0 %v2129
    %2549 = vmatmul.mubr.bf16.gmra.mrb[0].mxu0 %v2128
    %v2550 = vpop.f32.mrb[0].mxu0
    %v2551 = vadd.f32 0.0, %v2550
    %v2552 = vpop.f32.mrb[0].mxu0
    %v2553 = vpop.f32.mrb[0].mxu0
    %v2554 = vadd.f32 0.0, %v2553
    %v2555 = vpop.f32.mrb[0].mxu0
    %2556 = vmatprep.mubr.bf16.mxu0 %v2135
    %2557 = vmatmul.mubr.bf16.gmra.mrb[0].mxu0 %v2134
    %v2558 = vpop.f32.mrb[0].mxu0
    %v2559 = vadd.f32 0.0, %v2558
    %v2560 = vpop.f32.mrb[0].mxu0
    %v2561 = vpop.f32.mrb[0].mxu0
    %v2562 = vadd.f32 0.0, %v2561
    %v2563 = vpop.f32.mrb[0].mxu0
    %2564 = vmatprep.mubr.bf16.mxu0 %v2141
    %2565 = vmatmul.mubr.bf16.gmra.mrb[0].mxu0 %v2140
    %v2566 = vpop.f32.mrb[0].mxu0
    %v2567 = vadd.f32 0.0, %v2566
    %v2568 = vpop.f32.mrb[0].mxu0
    %v2569 = vpop.f32.mrb[0].mxu0
    %v2570 = vadd.f32 0.0, %v2569
    %v2571 = vpop.f32.mrb[0].mxu0
    %2572 = vmatprep.mubr.bf16.mxu0 %v2147
    %2573 = vmatmul.mubr.bf16.gmra.mrb[0].mxu0 %v2146
    %v2574 = vpop.f32.mrb[0].mxu0
    %v2575 = vadd.f32 0.0, %v2574
    %v2576 = vpop.f32.mrb[0].mxu0
    %v2577 = vpop.f32.mrb[0].mxu0
    %v2578 = vadd.f32 0.0, %v2577
    %v2579 = vpop.f32.mrb[0].mxu0
    %2580 = vmatprep.mubr.bf16.mxu0 %v2153
    %2581 = vmatmul.mubr.bf16.gmra.mrb[0].mxu0 %v2152
    %v2582 = vpop.f32.mrb[0].mxu0
    %v2583 = vadd.f32 0.0, %v2582
    %v2584 = vpop.f32.mrb[0].mxu0
    %v2585 = vpop.f32.mrb[0].mxu0
    %v2586 = vadd.f32 0.0, %v2585
    %v2587 = vpop.f32.mrb[0].mxu0
    %2588 = vmatprep.mubr.bf16.mxu0 %v2159
    %2589 = vmatmul.mubr.bf16.gmra.mrb[0].mxu0 %v2158
    %v2590 = vpop.f32.mrb[0].mxu0
    %v2591 = vadd.f32 0.0, %v2590
    %v2592 = vpop.f32.mrb[0].mxu0
    %v2593 = vpop.f32.mrb[0].mxu0
    %v2594 = vadd.f32 0.0, %v2593
    %v2595 = vpop.f32.mrb[0].mxu0
    %2596 = vdwg.mxu0
    %2597 = vmatprep.subr.bf16.mxu0 0
    %2598 = vmatpush1.bf16.msra.mxu0 %v2420
    %2599 = vmatprep.subr.bf16.mxu0 0
    %2600 = vmatpush1.bf16.msra.mxu0 %v2421
    %2601 = vmatprep.subr.bf16.mxu0 0
    %2602 = vmatpush1.bf16.msra.mxu0 %v2422
    %2603 = vmatprep.subr.bf16.mxu0 0
    %2604 = vmatpush1.bf16.msra.mxu0 %v2423
    %2605 = vmatprep.subr.bf16.mxu0 0
    %2606 = vmatpush1.bf16.msra.mxu0 %v2424
    %2607 = vmatprep.subr.bf16.mxu0 0
    %2608 = vmatpush1.bf16.msra.mxu0 %v2425
    %2609 = vmatprep.subr.bf16.mxu0 0
    %2610 = vmatpush1.bf16.msra.mxu0 %v2426
    %2611 = vmatprep.subr.bf16.mxu0 0
    %2612 = vmatpush1.bf16.msra.mxu0 %v2427
    %2613 = vmatprep.subr.bf16.mxu0 0
    %2614 = vmatpush1.bf16.msra.mxu0 %v2428
    %2615 = vmatprep.subr.bf16.mxu0 0
    %2616 = vmatpush1.bf16.msra.mxu0 %v2429
    %2617 = vmatprep.subr.bf16.mxu0 0
    %2618 = vmatpush1.bf16.msra.mxu0 %v2430
    %2619 = vmatprep.subr.bf16.mxu0 0
    %2620 = vmatpush1.bf16.msra.mxu0 %v2431
    %2621 = vmatprep.subr.bf16.mxu0 0
    %2622 = vmatpush1.bf16.msra.mxu0 %v2432
    %2623 = vmatprep.subr.bf16.mxu0 0
    %2624 = vmatpush1.bf16.msra.mxu0 %v2433
    %2625 = vmatprep.subr.bf16.mxu0 0
    %2626 = vmatpush1.bf16.msra.mxu0 %v2434
    %2627 = vmatprep.subr.bf16.mxu0 0
    %2628 = vmatpush1.bf16.msra.mxu0 %v2435
    %2629 = vmatprep.mubr.bf16.mxu0 %v2119
    %2630 = vmatmul.mubr.bf16.gmra.mrb[0].mxu0 %v2118
    %v2631 = vpop.f32.mrb[0].mxu0
    %v2632 = vadd.f32 %v2535, %v2631
    %v2633 = vpop.f32.mrb[0].mxu0
    %v2634 = vpop.f32.mrb[0].mxu0
    %v2635 = vadd.f32 %v2538, %v2634
    %v2636 = vpop.f32.mrb[0].mxu0
    %2637 = vmatprep.mubr.bf16.mxu0 %v2125
    %2638 = vmatmul.mubr.bf16.gmra.mrb[0].mxu0 %v2124
    %v2639 = vpop.f32.mrb[0].mxu0
    %v2640 = vadd.f32 %v2543, %v2639
    %v2641 = vpop.f32.mrb[0].mxu0
    %v2642 = vpop.f32.mrb[0].mxu0
    %v2643 = vadd.f32 %v2546, %v2642
    %v2644 = vpop.f32.mrb[0].mxu0
    %2645 = vmatprep.mubr.bf16.mxu0 %v2131
    %2646 = vmatmul.mubr.bf16.gmra.mrb[0].mxu0 %v2130
    %v2647 = vpop.f32.mrb[0].mxu0
    %v2648 = vadd.f32 %v2551, %v2647
    %v2649 = vpop.f32.mrb[0].mxu0
    %v2650 = vpop.f32.mrb[0].mxu0
    %v2651 = vadd.f32 %v2554, %v2650
    %v2652 = vpop.f32.mrb[0].mxu0
    %2653 = vmatprep.mubr.bf16.mxu0 %v2137
    %2654 = vmatmul.mubr.bf16.gmra.mrb[0].mxu0 %v2136
    %v2655 = vpop.f32.mrb[0].mxu0
    %v2656 = vadd.f32 %v2559, %v2655
    %v2657 = vpop.f32.mrb[0].mxu0
    %v2658 = vpop.f32.mrb[0].mxu0
    %v2659 = vadd.f32 %v2562, %v2658
    %v2660 = vpop.f32.mrb[0].mxu0
    %2661 = vmatprep.mubr.bf16.mxu0 %v2143
    %2662 = vmatmul.mubr.bf16.gmra.mrb[0].mxu0 %v2142
    %v2663 = vpop.f32.mrb[0].mxu0
    %v2664 = vadd.f32 %v2567, %v2663
    %v2665 = vpop.f32.mrb[0].mxu0
    %v2666 = vpop.f32.mrb[0].mxu0
    %v2667 = vadd.f32 %v2570, %v2666
    %v2668 = vpop.f32.mrb[0].mxu0
    %2669 = vmatprep.mubr.bf16.mxu0 %v2149
    %2670 = vmatmul.mubr.bf16.gmra.mrb[0].mxu0 %v2148
    %v2671 = vpop.f32.mrb[0].mxu0
    %v2672 = vadd.f32 %v2575, %v2671
    %v2673 = vpop.f32.mrb[0].mxu0
    %v2674 = vpop.f32.mrb[0].mxu0
    %v2675 = vadd.f32 %v2578, %v2674
    %v2676 = vpop.f32.mrb[0].mxu0
    %2677 = vmatprep.mubr.bf16.mxu0 %v2155
    %2678 = vmatmul.mubr.bf16.gmra.mrb[0].mxu0 %v2154
    %v2679 = vpop.f32.mrb[0].mxu0
    %v2680 = vadd.f32 %v2583, %v2679
    %v2681 = vpop.f32.mrb[0].mxu0
    %v2682 = vpop.f32.mrb[0].mxu0
    %v2683 = vadd.f32 %v2586, %v2682
    %v2684 = vpop.f32.mrb[0].mxu0
    %2685 = vmatprep.mubr.bf16.mxu0 %v2161
    %2686 = vmatmul.mubr.bf16.gmra.mrb[0].mxu0 %v2160
    %v2687 = vpop.f32.mrb[0].mxu0
    %v2688 = vadd.f32 %v2591, %v2687
    %v2689 = vpop.f32.mrb[0].mxu0
    %v2690 = vpop.f32.mrb[0].mxu0
    %v2691 = vadd.f32 %v2594, %v2690
    %v2692 = vpop.f32.mrb[0].mxu0
    %2693 = vdwg.mxu0
    %2694 = vmatprep.subr.bf16.mxu0 0
    %2695 = vmatpush1.bf16.msra.mxu0 %v2436
    %2696 = vmatprep.subr.bf16.mxu0 0
    %2697 = vmatpush1.bf16.msra.mxu0 %v2437
    %2698 = vmatprep.subr.bf16.mxu0 0
    %2699 = vmatpush1.bf16.msra.mxu0 %v2438
    %2700 = vmatprep.subr.bf16.mxu0 0
    %2701 = vmatpush1.bf16.msra.mxu0 %v2439
    %2702 = vmatprep.subr.bf16.mxu0 0
    %2703 = vmatpush1.bf16.msra.mxu0 %v2440
    %2704 = vmatprep.subr.bf16.mxu0 0
    %2705 = vmatpush1.bf16.msra.mxu0 %v2441
    %2706 = vmatprep.subr.bf16.mxu0 0
    %2707 = vmatpush1.bf16.msra.mxu0 %v2442
    %2708 = vmatprep.subr.bf16.mxu0 0
    %2709 = vmatpush1.bf16.msra.mxu0 %v2443
    %2710 = vmatprep.subr.bf16.mxu0 0
    %2711 = vmatpush1.bf16.msra.mxu0 %v2444
    %2712 = vmatprep.subr.bf16.mxu0 0
    %2713 = vmatpush1.bf16.msra.mxu0 %v2445
    %2714 = vmatprep.subr.bf16.mxu0 0
    %2715 = vmatpush1.bf16.msra.mxu0 %v2446
    %2716 = vmatprep.subr.bf16.mxu0 0
    %2717 = vmatpush1.bf16.msra.mxu0 %v2447
    %2718 = vmatprep.subr.bf16.mxu0 0
    %2719 = vmatpush1.bf16.msra.mxu0 %v2448
    %2720 = vmatprep.subr.bf16.mxu0 0
    %2721 = vmatpush1.bf16.msra.mxu0 %v2449
    %2722 = vmatprep.subr.bf16.mxu0 0
    %2723 = vmatpush1.bf16.msra.mxu0 %v2450
    %2724 = vmatprep.subr.bf16.mxu0 0
    %2725 = vmatpush1.bf16.msra.mxu0 %v2451
    %2726 = vmatprep.mubr.bf16.mxu0 %v2121
    %2727 = vmatmul.mubr.bf16.gmra.mrb[0].mxu0 %v2120
    %v2728 = vpop.f32.mrb[0].mxu0
    %v2729 = vadd.f32 %v2632, %v2728
    %v2730 = vpop.f32.mrb[0].mxu0
    %v2731 = vpop.f32.mrb[0].mxu0
    %v2732 = vadd.f32 %v2635, %v2731
    %v2733 = vpop.f32.mrb[0].mxu0
    %2734 = vmatprep.mubr.bf16.mxu0 %v2127
    %2735 = vmatmul.mubr.bf16.gmra.mrb[0].mxu0 %v2126
    %v2736 = vpop.f32.mrb[0].mxu0
    %v2737 = vadd.f32 %v2640, %v2736
    %v2738 = vpop.f32.mrb[0].mxu0
    %v2739 = vpop.f32.mrb[0].mxu0
    %v2740 = vadd.f32 %v2643, %v2739
    %v2741 = vpop.f32.mrb[0].mxu0
    %2742 = vmatprep.mubr.bf16.mxu0 %v2133
    %2743 = vmatmul.mubr.bf16.gmra.mrb[0].mxu0 %v2132
    %v2744 = vpop.f32.mrb[0].mxu0
    %v2745 = vadd.f32 %v2648, %v2744
    %v2746 = vpop.f32.mrb[0].mxu0
    %v2747 = vpop.f32.mrb[0].mxu0
    %v2748 = vadd.f32 %v2651, %v2747
    %v2749 = vpop.f32.mrb[0].mxu0
    %2750 = vmatprep.mubr.bf16.mxu0 %v2139
    %2751 = vmatmul.mubr.bf16.gmra.mrb[0].mxu0 %v2138
    %v2752 = vpop.f32.mrb[0].mxu0
    %v2753 = vadd.f32 %v2656, %v2752
    %v2754 = vpop.f32.mrb[0].mxu0
    %v2755 = vpop.f32.mrb[0].mxu0
    %v2756 = vadd.f32 %v2659, %v2755
    %v2757 = vpop.f32.mrb[0].mxu0
    %2758 = vmatprep.mubr.bf16.mxu0 %v2145
    %2759 = vmatmul.mubr.bf16.gmra.mrb[0].mxu0 %v2144
    %v2760 = vpop.f32.mrb[0].mxu0
    %v2761 = vadd.f32 %v2664, %v2760
    %v2762 = vpop.f32.mrb[0].mxu0
    %v2763 = vpop.f32.mrb[0].mxu0
    %v2764 = vadd.f32 %v2667, %v2763
    %v2765 = vpop.f32.mrb[0].mxu0
    %2766 = vmatprep.mubr.bf16.mxu0 %v2151
    %2767 = vmatmul.mubr.bf16.gmra.mrb[0].mxu0 %v2150
    %v2768 = vpop.f32.mrb[0].mxu0
    %v2769 = vadd.f32 %v2672, %v2768
    %v2770 = vpop.f32.mrb[0].mxu0
    %v2771 = vpop.f32.mrb[0].mxu0
    %v2772 = vadd.f32 %v2675, %v2771
    %v2773 = vpop.f32.mrb[0].mxu0
    %2774 = vmatprep.mubr.bf16.mxu0 %v2157
    %2775 = vmatmul.mubr.bf16.gmra.mrb[0].mxu0 %v2156
    %v2776 = vpop.f32.mrb[0].mxu0
    %v2777 = vadd.f32 %v2680, %v2776
    %v2778 = vpop.f32.mrb[0].mxu0
    %v2779 = vpop.f32.mrb[0].mxu0
    %v2780 = vadd.f32 %v2683, %v2779
    %v2781 = vpop.f32.mrb[0].mxu0
    %2782 = vmatprep.mubr.bf16.mxu0 %v2163
    %2783 = vmatmul.mubr.bf16.gmra.mrb[0].mxu0 %v2162
    %v2784 = vpop.f32.mrb[0].mxu0
    %v2785 = vadd.f32 %v2688, %v2784
    %v2786 = vpop.f32.mrb[0].mxu0
    %v2787 = vpop.f32.mrb[0].mxu0
    %v2788 = vadd.f32 %v2691, %v2787
    %v2789 = vpop.f32.mrb[0].mxu0
    %2790 = vdwg.mxu0
    %v2791 = vld [vmem:[%s8] sm:$0x1]
    %v2793 = vlaneseq
    %v2794 = vshrl.u32 %v2793, 7
    %v2795 = vsub.s32 0, %v2794
    %v2796 = vrot.slane %v2791, %v2795
    %v2798 = vmul.f32 %v2729, %v2796
    %v2799 = vmul.f32 %v2732, %v2796
    %v2800 = vmul.f32 %v2737, %v2796
    %v2801 = vmul.f32 %v2740, %v2796
    %v2802 = vmul.f32 %v2745, %v2796
    %v2803 = vmul.f32 %v2748, %v2796
    %v2804 = vmul.f32 %v2753, %v2796
    %v2805 = vmul.f32 %v2756, %v2796
    %v2806 = vmul.f32 %v2761, %v2796
    %v2807 = vmul.f32 %v2764, %v2796
    %v2808 = vmul.f32 %v2769, %v2796
    %v2809 = vmul.f32 %v2772, %v2796
    %v2810 = vmul.f32 %v2777, %v2796
    %v2811 = vmul.f32 %v2780, %v2796
    %v2812 = vmul.f32 %v2785, %v2796
    %v2813 = vmul.f32 %v2788, %v2796
    %v2814 = vld [vmem:[%s9] sm:$0x1]
    %v2816 = vlaneseq
    %v2817 = vshrl.u32 %v2816, 7
    %v2818 = vsub.s32 0, %v2817
    %v2819 = vrot.slane %v2814, %v2818
    %v2821 = vadd.f32 %v2798, %v2819
    %v2822 = vadd.f32 %v2799, %v2819
    %v2823 = vadd.f32 %v2800, %v2819
    %v2824 = vadd.f32 %v2801, %v2819
    %v2825 = vadd.f32 %v2802, %v2819
    %v2826 = vadd.f32 %v2803, %v2819
    %v2827 = vadd.f32 %v2804, %v2819
    %v2828 = vadd.f32 %v2805, %v2819
    %v2829 = vadd.f32 %v2806, %v2819
    %v2830 = vadd.f32 %v2807, %v2819
    %v2831 = vadd.f32 %v2808, %v2819
    %v2832 = vadd.f32 %v2809, %v2819
    %v2833 = vadd.f32 %v2810, %v2819
    %v2834 = vadd.f32 %v2811, %v2819
    %v2835 = vadd.f32 %v2812, %v2819
    %v2836 = vadd.f32 %v2813, %v2819
    %v2837 = vmax.f32 %v2821, 0.0
    %v2838 = vmax.f32 %v2822, 0.0
    %v2839 = vmax.f32 %v2823, 0.0
    %v2840 = vmax.f32 %v2824, 0.0
    %v2841 = vmax.f32 %v2825, 0.0
    %v2842 = vmax.f32 %v2826, 0.0
    %v2843 = vmax.f32 %v2827, 0.0
    %v2844 = vmax.f32 %v2828, 0.0
    %v2845 = vmax.f32 %v2829, 0.0
    %v2846 = vmax.f32 %v2830, 0.0
    %v2847 = vmax.f32 %v2831, 0.0
    %v2848 = vmax.f32 %v2832, 0.0
    %v2849 = vmax.f32 %v2833, 0.0
    %v2850 = vmax.f32 %v2834, 0.0
    %v2851 = vmax.f32 %v2835, 0.0
    %v2852 = vmax.f32 %v2836, 0.0
    %v2853 = vadd.f32 %v2837, %v2838
    %v2854 = vadd.f32 %v2853, %v2839
    %v2855 = vadd.f32 %v2854, %v2840
    %v2856 = vadd.f32 %v2855, %v2841
    %v2857 = vadd.f32 %v2856, %v2842
    %v2858 = vadd.f32 %v2857, %v2843
    %v2859 = vadd.f32 %v2858, %v2844
    %v2860 = vadd.f32 %v2859, %v2845
    %v2861 = vadd.f32 %v2860, %v2846
    %v2862 = vadd.f32 %v2861, %v2847
    %v2863 = vadd.f32 %v2862, %v2848
    %v2864 = vadd.f32 %v2863, %v2849
    %v2865 = vadd.f32 %v2864, %v2850
    %v2866 = vadd.f32 %v2865, %v2851
    %v2867 = vadd.f32 %v2866, %v2852
    %v2868 = vmul.f32 %v2867, 0.0625
    %2869 = vst [vmem:[#allocation12] sm:$0xff] %v2868
    // Predicated region
    $region58: #{tpu_custom_call.1} parent=1 // pred_check
      _
    $region59: #{tpu_custom_call.1} parent=1 // pred_check_branch
      %2871 = sbr.rel (0) target = $region61
    $region60: #{tpu_custom_call.1} parent=1 // pred_region
      %s2873 = ssub.s32 128, 128
      %2874 = vsyncadd [#allocation6], %s2873
      %s2876 = sshll.u32 [#allocation12], 4
      %s2877 = int_to_ptr.vmem [resolvable:$true] %s2876
      %2879 = dma.vmem_to_hbm [thread:$0]  %s2877, 128, %s10, [#allocation6]
    $region61: #{tpu_custom_call.1} parent=1 // pred_fallthru
      _
    // Predicated region
    $region62: #{tpu_custom_call.1} parent=1 // pred_check
      _
    $region63: #{tpu_custom_call.1} parent=1 // pred_check_branch
      %2881 = sbr.rel (0) target = $region65
    $region64: #{tpu_custom_call.1} parent=1 // pred_region
      %2882 = dma.done [#allocation6], 128
    $region65: #{tpu_custom_call.1} parent=1 // pred_fallthru
      _
    %2883 = vsyncpa [#allocation5], 1
    %2884 = vsyncpa [#allocation8], 1
    %2885 = vsyncpa [#allocation11], 1
    %2886 = vsyncpa [#allocation6], 1

</llo_original>
